<compile_context>
chip_gen: v5e
topology: v5e:2x2
jax: 0.10.0
libtpu: 0.0.40
codegen_flags: <defaults>
</compile_context>

<pallas_src>
import numpy as np
import jax
import jax.numpy as jnp
from jax.experimental import pallas as pl
from jax.experimental.pallas import tpu as pltpu


def round_up(x, m):
    return (x + m - 1) // m * m


# ----------------------------------------------------------------------------
# Pallas kernel: fused two-branch MLP + classification head.
# (BatchNorm and the affine branch-output Linears are already folded into the
#  weights/bias in the wrapper -> kernel is 4 matmuls + bias + ReLU + sigmoid.)
# ----------------------------------------------------------------------------
def hybrid_mlp_kernel(
    xt_ref, xs_ref,
    w1_ref, b1_ref,          # triplet branch: Linear(3D->W) with BN folded
    w2_ref, b2_ref,          # sentence branch: Linear(2304->W) with BN folded
    w13_ref, w23_ref, b3_ref,  # composed (w1b@w3a_hi), (w2b@w3a_lo), folded bias
    w4_ref, b4_ref,          # head Linear(W->1), padded to 128 lanes
    out_ref,
):
    f32 = jnp.float32
    bf16 = jnp.bfloat16

    # ---- triplet branch: Linear(+folded BN) -> ReLU ----
    h1 = jnp.dot(xt_ref[...], w1_ref[...], preferred_element_type=f32) + b1_ref[...]
    h1 = jnp.maximum(h1, 0.0).astype(bf16)

    # ---- sentence branch: Linear(+folded BN) -> ReLU ----
    h2 = jnp.dot(xs_ref[...], w2_ref[...], preferred_element_type=f32) + b2_ref[...]
    h2 = jnp.maximum(h2, 0.0).astype(bf16)

    # ---- classification: composed split-weight accumulate (no lane concat,
    #      branch-output Linears pre-folded) -> ReLU ----
    h3 = (jnp.dot(h1, w13_ref[...], preferred_element_type=f32)
          + jnp.dot(h2, w23_ref[...], preferred_element_type=f32)
          + b3_ref[...])
    h3 = jnp.maximum(h3, 0.0).astype(bf16)

    # ---- head: Linear(W->1) padded to 128 lanes -> sigmoid (lane-dense store) ----
    logit = jnp.dot(h3, w4_ref[...], preferred_element_type=f32) + b4_ref[...]
    out_ref[...] = jax.nn.sigmoid(logit)


# ----------------------------------------------------------------------------
# Wrapper-side parameter preparation: fold BN, compose affine chains, pad, cast bf16
# ----------------------------------------------------------------------------
def prep_kernel_params(kp):
    (w1a, b1a, s1, t1, w1b, b1b,
     w2a, b2a, s2, t2, w2b, b2b,
     w3a, b3a, s3, t3, w3b, b3b) = kp
    bf16 = jnp.bfloat16
    f32 = jnp.float32

    W = w1b.shape[0]

    # Fold eval-mode BatchNorm (per output feature) into the preceding Linear.
    w1a_f = w1a * s1
    b1a_f = b1a * s1 + t1
    w2a_f = w2a * s2
    b2a_f = b2a * s2 + t2
    w3a_f = w3a * s3                     # [2W, W]
    b3a_f = b3a * s3 + t3                # [1, W]

    # Split the concat weight (rows [:W] pair with h1, rows [W:] with h2) and compose
    # with the branch-output Linears -- they are back-to-back affine maps (ReLU is
    # before w1b/w2b, not after), so the composition is exact in f32.
    w3a_hi = w3a_f[:W, :]
    w3a_lo = w3a_f[W:, :]
    w13 = w1b @ w3a_hi                                   # [W, W]
    w23 = w2b @ w3a_lo                                   # [W, W]
    b3_fold = b1b @ w3a_hi + b2b @ w3a_lo + b3a_f        # [1, W]

    # Pad tiny triplet input dim (3*D) up to a multiple of 128 lanes.
    k1 = w1a_f.shape[0]
    k1_pad = max(128, round_up(k1, 128))
    w1a_p = jnp.zeros((k1_pad, W), f32).at[:k1, :].set(w1a_f)

    # Pad the N=1 head up to 128 lanes (slice column 0 outside the kernel).
    w3b_p = jnp.zeros((W, 128), f32).at[:, :1].set(w3b)
    b3b_p = jnp.zeros((1, 128), f32).at[:, :1].set(b3b)

    kernel_params = (
        w1a_p.astype(bf16), b1a_f,
        w2a_f.astype(bf16), b2a_f,
        w13.astype(bf16), w23.astype(bf16), b3_fold,
        w3b_p.astype(bf16), b3b_p,
    )
    return kernel_params, k1_pad


def hybrid_forward_pallas(xt, xs, kparams, tile_b_max=256):
    """xt: [B, 3*D] triplet embedding concat (f32), xs: [B, 2304] sentence embedding (f32)."""
    B = xt.shape[0]
    kps, k1_pad = prep_kernel_params(kparams)

    # Batch tiling: multiple-of-8 tiles, weights stay VMEM-resident across tiles.
    b_pad = round_up(B, 8)
    tile_b = min(tile_b_max, b_pad)
    b_pad = round_up(b_pad, tile_b)

    bf16 = jnp.bfloat16
    xt_p = jnp.zeros((b_pad, k1_pad), bf16).at[:B, :xt.shape[1]].set(xt.astype(bf16))
    xs_p = jnp.zeros((b_pad, xs.shape[1]), bf16).at[:B, :].set(xs.astype(bf16))

    def batch_spec(a):
        return pl.BlockSpec((tile_b, a.shape[1]), lambda i: (i, 0))

    def weight_spec(a):
        # Grid-invariant: same block every batch tile -> single DMA, stays resident.
        return pl.BlockSpec(a.shape, lambda i: (0, 0))

    out = pl.pallas_call(
        hybrid_mlp_kernel,
        out_shape=jax.ShapeDtypeStruct((b_pad, 128), jnp.float32),
        grid=(b_pad // tile_b,),
        in_specs=[batch_spec(xt_p), batch_spec(xs_p)] + [weight_spec(a) for a in kps],
        out_specs=pl.BlockSpec((tile_b, 128), lambda i: (i, 0)),
        compiler_params=pltpu.CompilerParams(
            dimension_semantics=("parallel",),   # batch tiles independent (2 TCs on v7x)
            vmem_limit_bytes=32 << 20,
        ),
    )(xt_p, xs_p, *kps)

    return out[:B, 0:1]


# ----------------------------------------------------------------------------
# Parameter setup (deterministic), BN folding helper, and pure-JAX f32 reference
# ----------------------------------------------------------------------------
def fold_bn(gamma, beta, mean, var, eps=1e-5):
    scale = gamma / jnp.sqrt(var + eps)
    shift = beta - mean * scale
    return scale[None, :], shift[None, :]


def init_params(key, embedding_dim):
    D = embedding_dim
    W = int(25.6 * D)            # shallom_width
    S = 768 * 3                  # sentence_dim = 2304

    ks = jax.random.split(key, 32)
    i = iter(range(32))

    def linear(kw, kb, fan_in, fan_out):
        bound = 1.0 / np.sqrt(fan_in)
        w = jax.random.uniform(kw, (fan_in, fan_out), jnp.float32, -bound, bound)
        b = jax.random.uniform(kb, (1, fan_out), jnp.float32, -bound, bound)
        return w, b

    def bn(kg, kb, km, kv, n):
        gamma = jax.random.uniform(kg, (n,), jnp.float32, 0.5, 1.5)
        beta = jax.random.uniform(kb, (n,), jnp.float32, -0.1, 0.1)
        mean = jax.random.uniform(km, (n,), jnp.float32, -0.2, 0.2)
        var = jax.random.uniform(kv, (n,), jnp.float32, 0.5, 1.5)
        return fold_bn(gamma, beta, mean, var)

    # shallom: Linear(3D -> W), BN(W), Linear(W -> W)
    w1a, b1a = linear(ks[next(i)], ks[next(i)], 3 * D, W)
    s1, t1 = bn(ks[next(i)], ks[next(i)], ks[next(i)], ks[next(i)], W)
    w1b, b1b = linear(ks[next(i)], ks[next(i)], W, W)

    # shallom_sentence: Linear(2304 -> W), BN(W), Linear(W -> W)
    w2a, b2a = linear(ks[next(i)], ks[next(i)], S, W)
    s2, t2 = bn(ks[next(i)], ks[next(i)], ks[next(i)], ks[next(i)], W)
    w2b, b2b = linear(ks[next(i)], ks[next(i)], W, W)

    # classification: Linear(2W -> W), BN(W), Linear(W -> 1)
    w3a, b3a = linear(ks[next(i)], ks[next(i)], 2 * W, W)
    s3, t3 = bn(ks[next(i)], ks[next(i)], ks[next(i)], ks[next(i)], W)
    w3b, b3b = linear(ks[next(i)], ks[next(i)], W, 1)

    kparams = (w1a, b1a, s1, t1, w1b, b1b,
               w2a, b2a, s2, t2, w2b, b2b,
               w3a, b3a, s3, t3, w3b, b3b)
    return kparams, W, S


def reference_forward(xt, xs, kp):
    (w1a, b1a, s1, t1, w1b, b1b,
     w2a, b2a, s2, t2, w2b, b2b,
     w3a, b3a, s3, t3, w3b, b3b) = kp
    h1 = jnp.maximum((xt @ w1a + b1a) * s1 + t1, 0.0) @ w1b + b1b
    h2 = jnp.maximum((xs @ w2a + b2a) * s2 + t2, 0.0) @ w2b + b2b
    z = jnp.concatenate([h1, h2], axis=1)
    h3 = jnp.maximum((z @ w3a + b3a) * s3 + t3, 0.0)
    return jax.nn.sigmoid(h3 @ w3b + b3b)


# ----------------------------------------------------------------------------
# Main
# ----------------------------------------------------------------------------
if __name__ == "__main__":
    key = jax.random.PRNGKey(0)
    k_par, k_ent, k_rel, k_sen, k_idx = jax.random.split(key, 5)

    # Small, module-consistent shapes
    embedding_dim = 10        # -> shallom_width = int(25.6 * 10) = 256
    num_entities = 32
    num_relations = 8
    num_sentences = 16
    batch = 8

    kparams, W, S = init_params(k_par, embedding_dim)

    # Frozen embedding tables (stand-ins for dataset.emb_* loaded weights)
    ent_tab = jax.random.normal(k_ent, (num_entities, embedding_dim), jnp.float32)
    rel_tab = jax.random.normal(k_rel, (num_relations, embedding_dim), jnp.float32)
    sen_tab = jax.random.normal(k_sen, (num_sentences, S), jnp.float32)

    ki = jax.random.split(k_idx, 4)
    e1_idx = jax.random.randint(ki[0], (batch,), 0, num_entities)
    rel_idx = jax.random.randint(ki[1], (batch,), 0, num_relations)
    e2_idx = jax.random.randint(ki[2], (batch,), 0, num_entities)
    sen_idx = jax.random.randint(ki[3], (batch,), 0, num_sentences)

    # Glue: embedding gathers + concat (as in torch.cat([head, rel, tail], 1))
    xt = jnp.concatenate(
        [jnp.take(ent_tab, e1_idx, axis=0),
         jnp.take(rel_tab, rel_idx, axis=0),
         jnp.take(ent_tab, e2_idx, axis=0)], axis=1)          # [B, 3*D]
    xs = jnp.take(sen_tab, sen_idx, axis=0)                    # [B, 2304] (training table)

    out = hybrid_forward_pallas(xt, xs, kparams)
    out = jax.block_until_ready(out)

    ref = jax.block_until_ready(reference_forward(xt, xs, kparams))
    assert out.shape == (batch, 1)
    # bf16 weights/activations in the kernel -> loosened tolerance vs f32 reference.
    np.testing.assert_allclose(np.asarray(out), np.asarray(ref), rtol=2e-2, atol=2e-2)

    print("KERNEL_OK")
</pallas_src>

<mosaic_0001>
module attributes {stable_mosaic.version = 11 : i64} {
  func.func @hybrid_mlp_kernel(%arg0: i32, %arg1: memref<8x128xbf16, #tpu.memory_space<vmem>>, %arg2: memref<8x2304xbf16, #tpu.memory_space<vmem>>, %arg3: memref<128x256xbf16, #tpu.memory_space<vmem>>, %arg4: memref<1x256xf32, #tpu.memory_space<vmem>>, %arg5: memref<2304x256xbf16, #tpu.memory_space<vmem>>, %arg6: memref<1x256xf32, #tpu.memory_space<vmem>>, %arg7: memref<256x256xbf16, #tpu.memory_space<vmem>>, %arg8: memref<256x256xbf16, #tpu.memory_space<vmem>>, %arg9: memref<1x256xf32, #tpu.memory_space<vmem>>, %arg10: memref<256x128xbf16, #tpu.memory_space<vmem>>, %arg11: memref<1x128xf32, #tpu.memory_space<vmem>>, %arg12: memref<8x128xf32, #tpu.memory_space<vmem>>) attributes {dimension_semantics = [#tpu.dimension_semantics<parallel>], iteration_bounds = array<i64: 1>, scalar_prefetch = 0 : i64, scratch_operands = 0 : i64, tpu.core_type = #tpu.core_type<tc>, window_params = [{transform_indices = @transform_0, window_bounds = array<i64: 8, 128>}, {transform_indices = @transform_1, window_bounds = array<i64: 8, 2304>}, {pipeline_mode = #tpu.pipeline_mode<synchronous>, transform_indices = @transform_2, window_bounds = array<i64: 128, 256>}, {pipeline_mode = #tpu.pipeline_mode<synchronous>, transform_indices = @transform_3, window_bounds = array<i64: 1, 256>}, {pipeline_mode = #tpu.pipeline_mode<synchronous>, transform_indices = @transform_4, window_bounds = array<i64: 2304, 256>}, {pipeline_mode = #tpu.pipeline_mode<synchronous>, transform_indices = @transform_5, window_bounds = array<i64: 1, 256>}, {pipeline_mode = #tpu.pipeline_mode<synchronous>, transform_indices = @transform_6, window_bounds = array<i64: 256, 256>}, {pipeline_mode = #tpu.pipeline_mode<synchronous>, transform_indices = @transform_7, window_bounds = array<i64: 256, 256>}, {pipeline_mode = #tpu.pipeline_mode<synchronous>, transform_indices = @transform_8, window_bounds = array<i64: 1, 256>}, {pipeline_mode = #tpu.pipeline_mode<synchronous>, transform_indices = @transform_9, window_bounds = array<i64: 256, 128>}, {pipeline_mode = #tpu.pipeline_mode<synchronous>, transform_indices = @transform_10, window_bounds = array<i64: 1, 128>}, {transform_indices = @transform_11, window_bounds = array<i64: 8, 128>}]} {
    %c0 = arith.constant 0 : index
    %c0_0 = arith.constant 0 : index
    %0 = vector.load %arg1[%c0, %c0_0] : memref<8x128xbf16, #tpu.memory_space<vmem>>, vector<8x128xbf16>
    %c0_1 = arith.constant 0 : index
    %c0_2 = arith.constant 0 : index
    %1 = vector.load %arg3[%c0_1, %c0_2] : memref<128x256xbf16, #tpu.memory_space<vmem>>, vector<128x256xbf16>
    %cst = arith.constant dense<0.000000e+00> : vector<8x256xf32>
    %2 = tpu.matmul %0, %1, %cst {dimension_numbers = #tpu.dot_dimension_numbers<[1], [0], [0], [1], [0, 0, 1, 1], [], []>} : vector<8x128xbf16>, vector<128x256xbf16>, vector<8x256xf32> -> vector<8x256xf32>
    %c0_3 = arith.constant 0 : index
    %c0_4 = arith.constant 0 : index
    %3 = vector.load %arg4[%c0_3, %c0_4] : memref<1x256xf32, #tpu.memory_space<vmem>>, vector<1x256xf32>
    %4 = vector.broadcast %3 : vector<1x256xf32> to vector<8x256xf32>
    %5 = arith.addf %2, %4 : vector<8x256xf32>
    %cst_5 = arith.constant 0.000000e+00 : f32
    %6 = vector.broadcast %cst_5 : f32 to vector<8x256xf32>
    %7 = arith.maximumf %5, %6 : vector<8x256xf32>
    %8 = arith.truncf %7 : vector<8x256xf32> to vector<8x256xbf16>
    %c0_6 = arith.constant 0 : index
    %c0_7 = arith.constant 0 : index
    %9 = vector.load %arg2[%c0_6, %c0_7] : memref<8x2304xbf16, #tpu.memory_space<vmem>>, vector<8x2304xbf16>
    %c0_8 = arith.constant 0 : index
    %c0_9 = arith.constant 0 : index
    %10 = vector.load %arg5[%c0_8, %c0_9] : memref<2304x256xbf16, #tpu.memory_space<vmem>>, vector<2304x256xbf16>
    %cst_10 = arith.constant dense<0.000000e+00> : vector<8x256xf32>
    %11 = tpu.matmul %9, %10, %cst_10 {dimension_numbers = #tpu.dot_dimension_numbers<[1], [0], [0], [1], [0, 0, 1, 1], [], []>} : vector<8x2304xbf16>, vector<2304x256xbf16>, vector<8x256xf32> -> vector<8x256xf32>
    %c0_11 = arith.constant 0 : index
    %c0_12 = arith.constant 0 : index
    %12 = vector.load %arg6[%c0_11, %c0_12] : memref<1x256xf32, #tpu.memory_space<vmem>>, vector<1x256xf32>
    %13 = vector.broadcast %12 : vector<1x256xf32> to vector<8x256xf32>
    %14 = arith.addf %11, %13 : vector<8x256xf32>
    %cst_13 = arith.constant 0.000000e+00 : f32
    %15 = vector.broadcast %cst_13 : f32 to vector<8x256xf32>
    %16 = arith.maximumf %14, %15 : vector<8x256xf32>
    %17 = arith.truncf %16 : vector<8x256xf32> to vector<8x256xbf16>
    %c0_14 = arith.constant 0 : index
    %c0_15 = arith.constant 0 : index
    %18 = vector.load %arg7[%c0_14, %c0_15] : memref<256x256xbf16, #tpu.memory_space<vmem>>, vector<256x256xbf16>
    %cst_16 = arith.constant dense<0.000000e+00> : vector<8x256xf32>
    %19 = tpu.matmul %8, %18, %cst_16 {dimension_numbers = #tpu.dot_dimension_numbers<[1], [0], [0], [1], [0, 0, 1, 1], [], []>} : vector<8x256xbf16>, vector<256x256xbf16>, vector<8x256xf32> -> vector<8x256xf32>
    %c0_17 = arith.constant 0 : index
    %c0_18 = arith.constant 0 : index
    %20 = vector.load %arg8[%c0_17, %c0_18] : memref<256x256xbf16, #tpu.memory_space<vmem>>, vector<256x256xbf16>
    %cst_19 = arith.constant dense<0.000000e+00> : vector<8x256xf32>
    %21 = tpu.matmul %17, %20, %cst_19 {dimension_numbers = #tpu.dot_dimension_numbers<[1], [0], [0], [1], [0, 0, 1, 1], [], []>} : vector<8x256xbf16>, vector<256x256xbf16>, vector<8x256xf32> -> vector<8x256xf32>
    %22 = arith.addf %19, %21 : vector<8x256xf32>
    %c0_20 = arith.constant 0 : index
    %c0_21 = arith.constant 0 : index
    %23 = vector.load %arg9[%c0_20, %c0_21] : memref<1x256xf32, #tpu.memory_space<vmem>>, vector<1x256xf32>
    %24 = vector.broadcast %23 : vector<1x256xf32> to vector<8x256xf32>
    %25 = arith.addf %22, %24 : vector<8x256xf32>
    %cst_22 = arith.constant 0.000000e+00 : f32
    %26 = vector.broadcast %cst_22 : f32 to vector<8x256xf32>
    %27 = arith.maximumf %25, %26 : vector<8x256xf32>
    %28 = arith.truncf %27 : vector<8x256xf32> to vector<8x256xbf16>
    %c0_23 = arith.constant 0 : index
    %c0_24 = arith.constant 0 : index
    %29 = vector.load %arg10[%c0_23, %c0_24] : memref<256x128xbf16, #tpu.memory_space<vmem>>, vector<256x128xbf16>
    %cst_25 = arith.constant dense<0.000000e+00> : vector<8x128xf32>
    %30 = tpu.matmul %28, %29, %cst_25 {dimension_numbers = #tpu.dot_dimension_numbers<[1], [0], [0], [1], [0, 0, 1, 1], [], []>} : vector<8x256xbf16>, vector<256x128xbf16>, vector<8x128xf32> -> vector<8x128xf32>
    %c0_26 = arith.constant 0 : index
    %c0_27 = arith.constant 0 : index
    %31 = vector.load %arg11[%c0_26, %c0_27] : memref<1x128xf32, #tpu.memory_space<vmem>>, vector<1x128xf32>
    %32 = vector.broadcast %31 : vector<1x128xf32> to vector<8x128xf32>
    %33 = arith.addf %30, %32 : vector<8x128xf32>
    %34 = arith.negf %33 : vector<8x128xf32>
    %35 = math.exp %34 : vector<8x128xf32>
    %cst_28 = arith.constant 1.000000e+00 : f32
    %36 = vector.broadcast %cst_28 : f32 to vector<8x128xf32>
    %37 = arith.addf %36, %35 : vector<8x128xf32>
    %38 = arith.divf %36, %37 : vector<8x128xf32>
    %c0_29 = arith.constant 0 : index
    %c0_30 = arith.constant 0 : index
    %39 = vector.load %arg12[%c0_29, %c0_30] : memref<8x128xf32, #tpu.memory_space<vmem>>, vector<8x128xf32>
    tpu.vector_store %arg12[%c0_29, %c0_30], %38 {strides = array<i32>} : memref<8x128xf32, #tpu.memory_space<vmem>>, vector<8x128xf32>,
    return
  }
  func.func @transform_0(%arg0: i32) -> (i32, i32) {
    %c0_i32 = arith.constant 0 : i32
    %c0_i32_0 = arith.constant 0 : i32
    return %arg0, %c0_i32 : i32, i32
  }
  func.func @transform_1(%arg0: i32) -> (i32, i32) {
    %c0_i32 = arith.constant 0 : i32
    %c0_i32_0 = arith.constant 0 : i32
    return %arg0, %c0_i32 : i32, i32
  }
  func.func @transform_2(%arg0: i32) -> (i32, i32) {
    %c0_i32 = arith.constant 0 : i32
    %c0_i32_0 = arith.constant 0 : i32
    %c0_i32_1 = arith.constant 0 : i32
    return %c0_i32, %c0_i32_0 : i32, i32
  }
  func.func @transform_3(%arg0: i32) -> (i32, i32) {
    %c0_i32 = arith.constant 0 : i32
    %c0_i32_0 = arith.constant 0 : i32
    %c0_i32_1 = arith.constant 0 : i32
    return %c0_i32, %c0_i32_0 : i32, i32
  }
  func.func @transform_4(%arg0: i32) -> (i32, i32) {
    %c0_i32 = arith.constant 0 : i32
    %c0_i32_0 = arith.constant 0 : i32
    %c0_i32_1 = arith.constant 0 : i32
    return %c0_i32, %c0_i32_0 : i32, i32
  }
  func.func @transform_5(%arg0: i32) -> (i32, i32) {
    %c0_i32 = arith.constant 0 : i32
    %c0_i32_0 = arith.constant 0 : i32
    %c0_i32_1 = arith.constant 0 : i32
    return %c0_i32, %c0_i32_0 : i32, i32
  }
  func.func @transform_6(%arg0: i32) -> (i32, i32) {
    %c0_i32 = arith.constant 0 : i32
    %c0_i32_0 = arith.constant 0 : i32
    %c0_i32_1 = arith.constant 0 : i32
    return %c0_i32, %c0_i32_0 : i32, i32
  }
  func.func @transform_7(%arg0: i32) -> (i32, i32) {
    %c0_i32 = arith.constant 0 : i32
    %c0_i32_0 = arith.constant 0 : i32
    %c0_i32_1 = arith.constant 0 : i32
    return %c0_i32, %c0_i32_0 : i32, i32
  }
  func.func @transform_8(%arg0: i32) -> (i32, i32) {
    %c0_i32 = arith.constant 0 : i32
    %c0_i32_0 = arith.constant 0 : i32
    %c0_i32_1 = arith.constant 0 : i32
    return %c0_i32, %c0_i32_0 : i32, i32
  }
  func.func @transform_9(%arg0: i32) -> (i32, i32) {
    %c0_i32 = arith.constant 0 : i32
    %c0_i32_0 = arith.constant 0 : i32
    %c0_i32_1 = arith.constant 0 : i32
    return %c0_i32, %c0_i32_0 : i32, i32
  }
  func.func @transform_10(%arg0: i32) -> (i32, i32) {
    %c0_i32 = arith.constant 0 : i32
    %c0_i32_0 = arith.constant 0 : i32
    %c0_i32_1 = arith.constant 0 : i32
    return %c0_i32, %c0_i32_0 : i32, i32
  }
  func.func @transform_11(%arg0: i32) -> (i32, i32) {
    %c0_i32 = arith.constant 0 : i32
    %c0_i32_0 = arith.constant 0 : i32
    return %arg0, %c0_i32 : i32, i32
  }
}

</mosaic_0001>

<llo_original>
// kernel: tpu_custom_call.1
$region0: #{tpu_custom_call.1}
  #allocation0 [shape = 'u32[]', space=smem, size = 0x4, offset = 0x4, fixed_abs, tag = 'smem constant byte address 0x4 - core index']
  #allocation1 [shape = 'u32[72,128]{1,0:T(1,128)}', space=vmem, size = 0x9000, scoped, tag = 'internal scratch']
  %s0 = inlined_call_operand.hbm [shape: bf16[8,128], index: 0, kind: input, shape index: {}]
  %s1 = inlined_call_operand.hbm [shape: bf16[8,2304], index: 1, kind: input, shape index: {}]
  %s2 = inlined_call_operand.hbm [shape: bf16[128,256], index: 2, kind: input, shape index: {}]
  %s3 = inlined_call_operand.hbm [shape: f32[1,256], index: 3, kind: input, shape index: {}]
  %s4 = inlined_call_operand.hbm [shape: bf16[2304,256], index: 4, kind: input, shape index: {}]
  %s5 = inlined_call_operand.hbm [shape: f32[1,256], index: 5, kind: input, shape index: {}]
  %s6 = inlined_call_operand.hbm [shape: bf16[256,256], index: 6, kind: input, shape index: {}]
  %s7 = inlined_call_operand.hbm [shape: bf16[256,256], index: 7, kind: input, shape index: {}]
  %s8 = inlined_call_operand.hbm [shape: f32[1,256], index: 8, kind: input, shape index: {}]
  %s9 = inlined_call_operand.hbm [shape: bf16[256,128], index: 9, kind: input, shape index: {}]
  %s10 = inlined_call_operand.hbm [shape: f32[1,128], index: 10, kind: input, shape index: {}]
  %s11 = inlined_call_operand.hbm [shape: f32[8,128], index: 11, kind: output, shape index: {}]
  %s12 = sld [smem:[#allocation0]]
  $region98: #{tpu_custom_call.1} parent=0
    _
  %s14 = ssub.s32 1, %s12
  %s15 = scalar_select 0, %s14, %s12
  $region1: #{tpu_custom_call.1} parent=0
    #allocation2 [shape = 'u8[2048]{0}', space=vmem, size = 0x800, scoped, tag = 'input window, operand 0, single buffered']
    #allocation3 [shape = 's32[1]{0}', space=sflag, size = 0x4, scoped, tag = 'scoped memory for tpu_custom_call.1']
    #allocation4 [shape = 's32[1]{0}', space=sflag, size = 0x4, scoped, tag = 'scoped memory for tpu_custom_call.1']
    #allocation5 [shape = 'u8[36864]{0}', space=vmem, size = 0x9000, scoped, tag = 'input window, operand 1, single buffered']
    #allocation6 [shape = 's32[1]{0}', space=sflag, size = 0x4, scoped, tag = 'scoped memory for tpu_custom_call.1']
    #allocation7 [shape = 'u8[65536]{0}', space=vmem, size = 0x10000, scoped, tag = 'input window, operand 2, single buffered']
    #allocation8 [shape = 'u8[1024]{0}', space=vmem, size = 0x400, scoped, tag = 'input window, operand 3, single buffered']
    #allocation9 [shape = 's32[1]{0}', space=sflag, size = 0x4, scoped, tag = 'scoped memory for tpu_custom_call.1']
    #allocation10 [shape = 'u8[1179648]{0}', space=vmem, size = 0x120000, scoped, tag = 'input window, operand 4, single buffered']
    #allocation11 [shape = 'u8[1024]{0}', space=vmem, size = 0x400, scoped, tag = 'input window, operand 5, single buffered']
    #allocation12 [shape = 's32[1]{0}', space=sflag, size = 0x4, scoped, tag = 'scoped memory for tpu_custom_call.1']
    #allocation13 [shape = 'u8[131072]{0}', space=vmem, size = 0x20000, scoped, tag = 'input window, operand 6, single buffered']
    #allocation14 [shape = 'u8[131072]{0}', space=vmem, size = 0x20000, scoped, tag = 'input window, operand 7, single buffered']
    #allocation15 [shape = 's32[1]{0}', space=sflag, size = 0x4, scoped, tag = 'scoped memory for tpu_custom_call.1']
    #allocation16 [shape = 'u8[1024]{0}', space=vmem, size = 0x400, scoped, tag = 'input window, operand 8, single buffered']
    #allocation17 [shape = 'u8[65536]{0}', space=vmem, size = 0x10000, scoped, tag = 'input window, operand 9, single buffered']
    #allocation18 [shape = 's32[1]{0}', space=sflag, size = 0x4, scoped, tag = 'scoped memory for tpu_custom_call.1']
    #allocation19 [shape = 'u8[512]{0}', space=vmem, size = 0x400, scoped, tag = 'input window, operand 10, single buffered']
    #allocation20 [shape = 'u8[4096]{0}', space=vmem, size = 0x1000, scoped, tag = 'output window, operand 0, single buffered']
    %16 = vsyncpa [#allocation3], 0
    %17 = vsyncpa [#allocation6], 0
    %18 = vsyncpa [#allocation9], 0
    %19 = vsyncpa [#allocation12], 0
    %20 = vsyncpa [#allocation15], 0
    %21 = vsyncpa [#allocation18], 0
    %22 = vsyncpa [#allocation4], 0
    // Predicated region
    $region2: #{tpu_custom_call.1} parent=1 // pred_check
      _
    $region3: #{tpu_custom_call.1} parent=1 // pred_check_branch
      %24 = sbr.rel (0) target = $region5
    $region4: #{tpu_custom_call.1} parent=1 // pred_region
      %26 = vsyncadd [#allocation3], 0
      %s28 = sshll.u32 %s0, 4
      %s29 = int_to_ptr.hbm [resolvable:$true] %s28
      %s30 = sshll.u32 [#allocation2], 4
      %s31 = int_to_ptr.vmem [resolvable:$true] %s30
      %33 = dma.hbm_to_vmem [thread:$0]  %s29, 64, %s31, [#allocation3]
    $region5: #{tpu_custom_call.1} parent=1 // pred_fallthru
      _
    // Predicated region
    $region6: #{tpu_custom_call.1} parent=1 // pred_check
      _
    $region7: #{tpu_custom_call.1} parent=1 // pred_check_branch
      %35 = sbr.rel (0) target = $region9
    $region8: #{tpu_custom_call.1} parent=1 // pred_region
      %37 = vsyncadd [#allocation6], 0
      %s39 = sshll.u32 %s1, 4
      %s40 = int_to_ptr.hbm [resolvable:$true] %s39
      %s41 = sshll.u32 [#allocation5], 4
      %s42 = int_to_ptr.vmem [resolvable:$true] %s41
      %44 = dma.hbm_to_vmem [thread:$0]  %s40, 1152, %s42, [#allocation6]
    $region9: #{tpu_custom_call.1} parent=1 // pred_fallthru
      _
    // Predicated region
    $region10: #{tpu_custom_call.1} parent=1 // pred_check
      _
    $region11: #{tpu_custom_call.1} parent=1 // pred_check_branch
      %46 = sbr.rel (0) target = $region13
    $region12: #{tpu_custom_call.1} parent=1 // pred_region
      %48 = vsyncadd [#allocation6], 0
      %s49 = sshll.u32 %s2, 4
      %s50 = int_to_ptr.hbm [resolvable:$true] %s49
      %s51 = sshll.u32 [#allocation7], 4
      %s52 = int_to_ptr.vmem [resolvable:$true] %s51
      %57 = dma.hbm_to_vmem [thread:$0]  %s50, 2048, %s52, [#allocation6], 128, 128, 8
    $region13: #{tpu_custom_call.1} parent=1 // pred_fallthru
      _
    // Predicated region
    $region14: #{tpu_custom_call.1} parent=1 // pred_check
      _
    $region15: #{tpu_custom_call.1} parent=1 // pred_check_branch
      %59 = sbr.rel (0) target = $region17
    $region16: #{tpu_custom_call.1} parent=1 // pred_region
      %61 = vsyncadd [#allocation9], 0
      %s63 = sshll.u32 %s3, 4
      %s64 = int_to_ptr.hbm [resolvable:$true] %s63
      %s65 = sshll.u32 [#allocation8], 4
      %s66 = int_to_ptr.vmem [resolvable:$true] %s65
      %68 = dma.hbm_to_vmem [thread:$0]  %s64, 32, %s66, [#allocation9]
    $region17: #{tpu_custom_call.1} parent=1 // pred_fallthru
      _
    // Predicated region
    $region18: #{tpu_custom_call.1} parent=1 // pred_check
      _
    $region19: #{tpu_custom_call.1} parent=1 // pred_check_branch
      %70 = sbr.rel (0) target = $region21
    $region20: #{tpu_custom_call.1} parent=1 // pred_region
      %72 = vsyncadd [#allocation9], 0
      %s73 = sshll.u32 %s4, 4
      %s74 = int_to_ptr.hbm [resolvable:$true] %s73
      %s75 = sshll.u32 [#allocation10], 4
      %s76 = int_to_ptr.vmem [resolvable:$true] %s75
      %81 = dma.hbm_to_vmem [thread:$0]  %s74, 36864, %s76, [#allocation9], 128, 128, 8
    $region21: #{tpu_custom_call.1} parent=1 // pred_fallthru
      _
    // Predicated region
    $region22: #{tpu_custom_call.1} parent=1 // pred_check
      _
    $region23: #{tpu_custom_call.1} parent=1 // pred_check_branch
      %83 = sbr.rel (0) target = $region25
    $region24: #{tpu_custom_call.1} parent=1 // pred_region
      %85 = vsyncadd [#allocation12], 0
      %s87 = sshll.u32 %s5, 4
      %s88 = int_to_ptr.hbm [resolvable:$true] %s87
      %s89 = sshll.u32 [#allocation11], 4
      %s90 = int_to_ptr.vmem [resolvable:$true] %s89
      %92 = dma.hbm_to_vmem [thread:$0]  %s88, 32, %s90, [#allocation12]
    $region25: #{tpu_custom_call.1} parent=1 // pred_fallthru
      _
    // Predicated region
    $region26: #{tpu_custom_call.1} parent=1 // pred_check
      _
    $region27: #{tpu_custom_call.1} parent=1 // pred_check_branch
      %94 = sbr.rel (0) target = $region29
    $region28: #{tpu_custom_call.1} parent=1 // pred_region
      %96 = vsyncadd [#allocation12], 0
      %s97 = sshll.u32 %s6, 4
      %s98 = int_to_ptr.hbm [resolvable:$true] %s97
      %s99 = sshll.u32 [#allocation13], 4
      %s100 = int_to_ptr.vmem [resolvable:$true] %s99
      %105 = dma.hbm_to_vmem [thread:$0]  %s98, 4096, %s100, [#allocation12], 128, 128, 8
    $region29: #{tpu_custom_call.1} parent=1 // pred_fallthru
      _
    // Predicated region
    $region30: #{tpu_custom_call.1} parent=1 // pred_check
      _
    $region31: #{tpu_custom_call.1} parent=1 // pred_check_branch
      %107 = sbr.rel (0) target = $region33
    $region32: #{tpu_custom_call.1} parent=1 // pred_region
      %109 = vsyncadd [#allocation15], 0
      %s110 = sshll.u32 %s7, 4
      %s111 = int_to_ptr.hbm [resolvable:$true] %s110
      %s112 = sshll.u32 [#allocation14], 4
      %s113 = int_to_ptr.vmem [resolvable:$true] %s112
      %118 = dma.hbm_to_vmem [thread:$0]  %s111, 4096, %s113, [#allocation15], 128, 128, 8
    $region33: #{tpu_custom_call.1} parent=1 // pred_fallthru
      _
    // Predicated region
    $region34: #{tpu_custom_call.1} parent=1 // pred_check
      _
    $region35: #{tpu_custom_call.1} parent=1 // pred_check_branch
      %120 = sbr.rel (0) target = $region37
    $region36: #{tpu_custom_call.1} parent=1 // pred_region
      %122 = vsyncadd [#allocation15], 0
      %s124 = sshll.u32 %s8, 4
      %s125 = int_to_ptr.hbm [resolvable:$true] %s124
      %s126 = sshll.u32 [#allocation16], 4
      %s127 = int_to_ptr.vmem [resolvable:$true] %s126
      %129 = dma.hbm_to_vmem [thread:$0]  %s125, 32, %s127, [#allocation15]
    $region37: #{tpu_custom_call.1} parent=1 // pred_fallthru
      _
    // Predicated region
    $region38: #{tpu_custom_call.1} parent=1 // pred_check
      _
    $region39: #{tpu_custom_call.1} parent=1 // pred_check_branch
      %131 = sbr.rel (0) target = $region41
    $region40: #{tpu_custom_call.1} parent=1 // pred_region
      %133 = vsyncadd [#allocation18], 0
      %s134 = sshll.u32 %s9, 4
      %s135 = int_to_ptr.hbm [resolvable:$true] %s134
      %s136 = sshll.u32 [#allocation17], 4
      %s137 = int_to_ptr.vmem [resolvable:$true] %s136
      %142 = dma.hbm_to_vmem [thread:$0]  %s135, 2048, %s137, [#allocation18], 64, 64, 4
    $region41: #{tpu_custom_call.1} parent=1 // pred_fallthru
      _
    // Predicated region
    $region42: #{tpu_custom_call.1} parent=1 // pred_check
      _
    $region43: #{tpu_custom_call.1} parent=1 // pred_check_branch
      %144 = sbr.rel (0) target = $region45
    $region44: #{tpu_custom_call.1} parent=1 // pred_region
      %146 = vsyncadd [#allocation18], 0
      %s148 = sshll.u32 %s10, 4
      %s149 = int_to_ptr.hbm [resolvable:$true] %s148
      %s150 = sshll.u32 [#allocation19], 4
      %s151 = int_to_ptr.vmem [resolvable:$true] %s150
      %153 = dma.hbm_to_vmem [thread:$0]  %s149, 16, %s151, [#allocation18]
    $region45: #{tpu_custom_call.1} parent=1 // pred_fallthru
      _
    // Predicated region
    $region46: #{tpu_custom_call.1} parent=1 // pred_check
      _
    $region47: #{tpu_custom_call.1} parent=1 // pred_check_branch
      %155 = sbr.rel (0) target = $region49
    $region48: #{tpu_custom_call.1} parent=1 // pred_region
      %157 = dma.done [#allocation3], 64
    $region49: #{tpu_custom_call.1} parent=1 // pred_fallthru
      _
    // Predicated region
    $region50: #{tpu_custom_call.1} parent=1 // pred_check
      _
    $region51: #{tpu_custom_call.1} parent=1 // pred_check_branch
      %159 = sbr.rel (0) target = $region53
    $region52: #{tpu_custom_call.1} parent=1 // pred_region
      %161 = dma.done [#allocation6], 1152
    $region53: #{tpu_custom_call.1} parent=1 // pred_fallthru
      _
    // Predicated region
    $region54: #{tpu_custom_call.1} parent=1 // pred_check
      _
    $region55: #{tpu_custom_call.1} parent=1 // pred_check_branch
      %163 = sbr.rel (0) target = $region57
    $region56: #{tpu_custom_call.1} parent=1 // pred_region
      %165 = dma.done [#allocation6], 2048
    $region57: #{tpu_custom_call.1} parent=1 // pred_fallthru
      _
    // Predicated region
    $region58: #{tpu_custom_call.1} parent=1 // pred_check
      _
    $region59: #{tpu_custom_call.1} parent=1 // pred_check_branch
      %167 = sbr.rel (0) target = $region61
    $region60: #{tpu_custom_call.1} parent=1 // pred_region
      %169 = dma.done [#allocation9], 32
    $region61: #{tpu_custom_call.1} parent=1 // pred_fallthru
      _
    // Predicated region
    $region62: #{tpu_custom_call.1} parent=1 // pred_check
      _
    $region63: #{tpu_custom_call.1} parent=1 // pred_check_branch
      %171 = sbr.rel (0) target = $region65
    $region64: #{tpu_custom_call.1} parent=1 // pred_region
      %173 = dma.done [#allocation9], 36864
    $region65: #{tpu_custom_call.1} parent=1 // pred_fallthru
      _
    // Predicated region
    $region66: #{tpu_custom_call.1} parent=1 // pred_check
      _
    $region67: #{tpu_custom_call.1} parent=1 // pred_check_branch
      %175 = sbr.rel (0) target = $region69
    $region68: #{tpu_custom_call.1} parent=1 // pred_region
      %177 = dma.done [#allocation12], 32
    $region69: #{tpu_custom_call.1} parent=1 // pred_fallthru
      _
    // Predicated region
    $region70: #{tpu_custom_call.1} parent=1 // pred_check
      _
    $region71: #{tpu_custom_call.1} parent=1 // pred_check_branch
      %179 = sbr.rel (0) target = $region73
    $region72: #{tpu_custom_call.1} parent=1 // pred_region
      %181 = dma.done [#allocation12], 4096
    $region73: #{tpu_custom_call.1} parent=1 // pred_fallthru
      _
    // Predicated region
    $region74: #{tpu_custom_call.1} parent=1 // pred_check
      _
    $region75: #{tpu_custom_call.1} parent=1 // pred_check_branch
      %183 = sbr.rel (0) target = $region77
    $region76: #{tpu_custom_call.1} parent=1 // pred_region
      %185 = dma.done [#allocation15], 4096
    $region77: #{tpu_custom_call.1} parent=1 // pred_fallthru
      _
    // Predicated region
    $region78: #{tpu_custom_call.1} parent=1 // pred_check
      _
    $region79: #{tpu_custom_call.1} parent=1 // pred_check_branch
      %187 = sbr.rel (0) target = $region81
    $region80: #{tpu_custom_call.1} parent=1 // pred_region
      %189 = dma.done [#allocation15], 32
    $region81: #{tpu_custom_call.1} parent=1 // pred_fallthru
      _
    // Predicated region
    $region82: #{tpu_custom_call.1} parent=1 // pred_check
      _
    $region83: #{tpu_custom_call.1} parent=1 // pred_check_branch
      %191 = sbr.rel (0) target = $region85
    $region84: #{tpu_custom_call.1} parent=1 // pred_region
      %193 = dma.done [#allocation18], 2048
    $region85: #{tpu_custom_call.1} parent=1 // pred_fallthru
      _
    // Predicated region
    $region86: #{tpu_custom_call.1} parent=1 // pred_check
      _
    $region87: #{tpu_custom_call.1} parent=1 // pred_check_branch
      %195 = sbr.rel (0) target = $region89
    $region88: #{tpu_custom_call.1} parent=1 // pred_region
      %197 = dma.done [#allocation18], 16
    $region89: #{tpu_custom_call.1} parent=1 // pred_fallthru
      _
    %v198 = vld [vmem:[#allocation2] sm:$0xf]
    %v199 = vld [vmem:[#allocation7] sm:$0xff]
    %v200 = vld [vmem:[#allocation7 + $0x8] sm:$0xff]
    %v201 = vld [vmem:[#allocation7 + $0x10] sm:$0xff]
    %v202 = vld [vmem:[#allocation7 + $0x18] sm:$0xff]
    %v203 = vld [vmem:[#allocation7 + $0x20] sm:$0xff]
    %v204 = vld [vmem:[#allocation7 + $0x28] sm:$0xff]
    %v205 = vld [vmem:[#allocation7 + $0x30] sm:$0xff]
    %v206 = vld [vmem:[#allocation7 + $0x38] sm:$0xff]
    %v207 = vld [vmem:[#allocation7 + $0x40] sm:$0xff]
    %v208 = vld [vmem:[#allocation7 + $0x48] sm:$0xff]
    %v209 = vld [vmem:[#allocation7 + $0x50] sm:$0xff]
    %v210 = vld [vmem:[#allocation7 + $0x58] sm:$0xff]
    %v211 = vld [vmem:[#allocation7 + $0x60] sm:$0xff]
    %v212 = vld [vmem:[#allocation7 + $0x68] sm:$0xff]
    %v213 = vld [vmem:[#allocation7 + $0x70] sm:$0xff]
    %v214 = vld [vmem:[#allocation7 + $0x78] sm:$0xff]
    %v215 = vld [vmem:[#allocation8] sm:$0x3]
    %v217 = vperm.slane %v215, 0
    %v218 = vperm.slane %v215, 1
    %v237 = vunpack.c.l.b16 %v199
    %v238 = vunpack.c.h.b16 %v199
    %v239 = vunpack.c.l.b16 %v200
    %v240 = vunpack.c.h.b16 %v200
    %v241 = vunpack.c.l.b16 %v201
    %v242 = vunpack.c.h.b16 %v201
    %v243 = vunpack.c.l.b16 %v202
    %v244 = vunpack.c.h.b16 %v202
    %v245 = vunpack.c.l.b16 %v203
    %v246 = vunpack.c.h.b16 %v203
    %v247 = vunpack.c.l.b16 %v204
    %v248 = vunpack.c.h.b16 %v204
    %v249 = vunpack.c.l.b16 %v205
    %v250 = vunpack.c.h.b16 %v205
    %v251 = vunpack.c.l.b16 %v206
    %v252 = vunpack.c.h.b16 %v206
    %v253 = vunpack.c.l.b16 %v207
    %v254 = vunpack.c.h.b16 %v207
    %v255 = vunpack.c.l.b16 %v208
    %v256 = vunpack.c.h.b16 %v208
    %v257 = vunpack.c.l.b16 %v209
    %v258 = vunpack.c.h.b16 %v209
    %v259 = vunpack.c.l.b16 %v210
    %v260 = vunpack.c.h.b16 %v210
    %v261 = vunpack.c.l.b16 %v211
    %v262 = vunpack.c.h.b16 %v211
    %v263 = vunpack.c.l.b16 %v212
    %v264 = vunpack.c.h.b16 %v212
    %v265 = vunpack.c.l.b16 %v213
    %v266 = vunpack.c.h.b16 %v213
    %v267 = vunpack.c.l.b16 %v214
    %v268 = vunpack.c.h.b16 %v214
    %v269 = vpack.c.b16 %v239, %v237
    %v270 = vpack.c.b16 %v240, %v238
    %v271 = vpack.c.b16 %v243, %v241
    %v272 = vpack.c.b16 %v244, %v242
    %v273 = vpack.c.b16 %v247, %v245
    %v274 = vpack.c.b16 %v248, %v246
    %v275 = vpack.c.b16 %v251, %v249
    %v276 = vpack.c.b16 %v252, %v250
    %v277 = vpack.c.b16 %v255, %v253
    %v278 = vpack.c.b16 %v256, %v254
    %v279 = vpack.c.b16 %v259, %v257
    %v280 = vpack.c.b16 %v260, %v258
    %v281 = vpack.c.b16 %v263, %v261
    %v282 = vpack.c.b16 %v264, %v262
    %v283 = vpack.c.b16 %v267, %v265
    %v284 = vpack.c.b16 %v268, %v266
    %301 = vmatpush.bf16.msra.mxu0 %v283
    %302 = vmatpush.bf16.msra.mxu0 %v281
    %303 = vmatpush.bf16.msra.mxu0 %v279
    %304 = vmatpush.bf16.msra.mxu0 %v277
    %305 = vmatpush.bf16.msra.mxu0 %v275
    %306 = vmatpush.bf16.msra.mxu0 %v273
    %307 = vmatpush.bf16.msra.mxu0 %v271
    %308 = vmatpush.bf16.msra.mxu0 %v269
    %309 = vmatmul.bf16.gmra.mxu0 %v198
    %v310 = vpop.f32.mrf.mxu0
    %v311 = vadd.f32 %v217, %v310
    %v312 = vpop.f32.mrf.mxu0
    %313 = vdwg.mxu0
    %314 = vmatpush.bf16.msra.mxu0 %v284
    %315 = vmatpush.bf16.msra.mxu0 %v282
    %316 = vmatpush.bf16.msra.mxu0 %v280
    %317 = vmatpush.bf16.msra.mxu0 %v278
    %318 = vmatpush.bf16.msra.mxu0 %v276
    %319 = vmatpush.bf16.msra.mxu0 %v274
    %320 = vmatpush.bf16.msra.mxu0 %v272
    %321 = vmatpush.bf16.msra.mxu0 %v270
    %322 = vmatmul.bf16.gmra.mxu0 %v198
    %v323 = vpop.f32.mrf.mxu0
    %v324 = vadd.f32 %v218, %v323
    %v325 = vpop.f32.mrf.mxu0
    %326 = vdwg.mxu0
    %v327 = vmax.f32 %v311, 0.0
    %v328 = vmax.f32 %v324, 0.0
    %v329 = vpack.c.bf16 %v327, %v327
    %v330 = vpack.c.bf16 %v328, %v328
    %v331 = vld [vmem:[#allocation5] sm:$0xff]
    %v332 = vld [vmem:[#allocation5 + $0x8] sm:$0xff]
    %v333 = vld [vmem:[#allocation5 + $0x10] sm:$0xff]
    %v334 = vld [vmem:[#allocation5 + $0x18] sm:$0xff]
    %v335 = vld [vmem:[#allocation5 + $0x20] sm:$0xff]
    %v336 = vld [vmem:[#allocation5 + $0x28] sm:$0xff]
    %v337 = vld [vmem:[#allocation5 + $0x30] sm:$0xff]
    %v338 = vld [vmem:[#allocation5 + $0x38] sm:$0xff]
    %v339 = vld [vmem:[#allocation5 + $0x40] sm:$0xff]
    %v340 = vld [vmem:[#allocation10] sm:$0xff]
    %v341 = vld [vmem:[#allocation10 + $0x8] sm:$0xff]
    %v342 = vld [vmem:[#allocation10 + $0x10] sm:$0xff]
    %v343 = vld [vmem:[#allocation10 + $0x18] sm:$0xff]
    %v344 = vld [vmem:[#allocation10 + $0x20] sm:$0xff]
    %v345 = vld [vmem:[#allocation10 + $0x28] sm:$0xff]
    %v346 = vld [vmem:[#allocation10 + $0x30] sm:$0xff]
    %v347 = vld [vmem:[#allocation10 + $0x38] sm:$0xff]
    %v348 = vld [vmem:[#allocation10 + $0x40] sm:$0xff]
    %v349 = vld [vmem:[#allocation10 + $0x48] sm:$0xff]
    %v350 = vld [vmem:[#allocation10 + $0x50] sm:$0xff]
    %v351 = vld [vmem:[#allocation10 + $0x58] sm:$0xff]
    %v352 = vld [vmem:[#allocation10 + $0x60] sm:$0xff]
    %v353 = vld [vmem:[#allocation10 + $0x68] sm:$0xff]
    %v354 = vld [vmem:[#allocation10 + $0x70] sm:$0xff]
    %v355 = vld [vmem:[#allocation10 + $0x78] sm:$0xff]
    %v356 = vld [vmem:[#allocation10 + $0x80] sm:$0xff]
    %v357 = vld [vmem:[#allocation10 + $0x88] sm:$0xff]
    %v358 = vld [vmem:[#allocation10 + $0x90] sm:$0xff]
    %v359 = vld [vmem:[#allocation10 + $0x98] sm:$0xff]
    %v360 = vld [vmem:[#allocation10 + $0xa0] sm:$0xff]
    %v361 = vld [vmem:[#allocation10 + $0xa8] sm:$0xff]
    %v362 = vld [vmem:[#allocation10 + $0xb0] sm:$0xff]
    %v363 = vld [vmem:[#allocation10 + $0xb8] sm:$0xff]
    %v364 = vld [vmem:[#allocation10 + $0xc0] sm:$0xff]
    %v365 = vld [vmem:[#allocation10 + $0xc8] sm:$0xff]
    %v366 = vld [vmem:[#allocation10 + $0xd0] sm:$0xff]
    %v367 = vld [vmem:[#allocation10 + $0xd8] sm:$0xff]
    %v368 = vld [vmem:[#allocation10 + $0xe0] sm:$0xff]
    %v369 = vld [vmem:[#allocation10 + $0xe8] sm:$0xff]
    %v370 = vld [vmem:[#allocation10 + $0xf0] sm:$0xff]
    %v371 = vld [vmem:[#allocation10 + $0xf8] sm:$0xff]
    %v372 = vld [vmem:[#allocation10 + $0x100] sm:$0xff]
    %v373 = vld [vmem:[#allocation10 + $0x108] sm:$0xff]
    %v374 = vld [vmem:[#allocation10 + $0x110] sm:$0xff]
    %v375 = vld [vmem:[#allocation10 + $0x118] sm:$0xff]
    %v376 = vld [vmem:[#allocation10 + $0x120] sm:$0xff]
    %v377 = vld [vmem:[#allocation10 + $0x128] sm:$0xff]
    %v378 = vld [vmem:[#allocation10 + $0x130] sm:$0xff]
    %v379 = vld [vmem:[#allocation10 + $0x138] sm:$0xff]
    %v380 = vld [vmem:[#allocation10 + $0x140] sm:$0xff]
    %v381 = vld [vmem:[#allocation10 + $0x148] sm:$0xff]
    %v382 = vld [vmem:[#allocation10 + $0x150] sm:$0xff]
    %v383 = vld [vmem:[#allocation10 + $0x158] sm:$0xff]
    %v384 = vld [vmem:[#allocation10 + $0x160] sm:$0xff]
    %v385 = vld [vmem:[#allocation10 + $0x168] sm:$0xff]
    %v386 = vld [vmem:[#allocation10 + $0x170] sm:$0xff]
    %v387 = vld [vmem:[#allocation10 + $0x178] sm:$0xff]
    %v388 = vld [vmem:[#allocation10 + $0x180] sm:$0xff]
    %v389 = vld [vmem:[#allocation10 + $0x188] sm:$0xff]
    %v390 = vld [vmem:[#allocation10 + $0x190] sm:$0xff]
    %v391 = vld [vmem:[#allocation10 + $0x198] sm:$0xff]
    %v392 = vld [vmem:[#allocation10 + $0x1a0] sm:$0xff]
    %v393 = vld [vmem:[#allocation10 + $0x1a8] sm:$0xff]
    %v394 = vld [vmem:[#allocation10 + $0x1b0] sm:$0xff]
    %v395 = vld [vmem:[#allocation10 + $0x1b8] sm:$0xff]
    %v396 = vld [vmem:[#allocation10 + $0x1c0] sm:$0xff]
    %v397 = vld [vmem:[#allocation10 + $0x1c8] sm:$0xff]
    %v398 = vld [vmem:[#allocation10 + $0x1d0] sm:$0xff]
    %v399 = vld [vmem:[#allocation10 + $0x1d8] sm:$0xff]
    %v400 = vld [vmem:[#allocation10 + $0x1e0] sm:$0xff]
    %v401 = vld [vmem:[#allocation10 + $0x1e8] sm:$0xff]
    %v402 = vld [vmem:[#allocation10 + $0x1f0] sm:$0xff]
    %v403 = vld [vmem:[#allocation10 + $0x1f8] sm:$0xff]
    %v404 = vld [vmem:[#allocation10 + $0x200] sm:$0xff]
    %v405 = vld [vmem:[#allocation10 + $0x208] sm:$0xff]
    %v406 = vld [vmem:[#allocation10 + $0x210] sm:$0xff]
    %v407 = vld [vmem:[#allocation10 + $0x218] sm:$0xff]
    %v408 = vld [vmem:[#allocation10 + $0x220] sm:$0xff]
    %v409 = vld [vmem:[#allocation10 + $0x228] sm:$0xff]
    %v410 = vld [vmem:[#allocation10 + $0x230] sm:$0xff]
    %v411 = vld [vmem:[#allocation10 + $0x238] sm:$0xff]
    %v412 = vld [vmem:[#allocation10 + $0x240] sm:$0xff]
    %v413 = vld [vmem:[#allocation10 + $0x248] sm:$0xff]
    %v414 = vld [vmem:[#allocation10 + $0x250] sm:$0xff]
    %v415 = vld [vmem:[#allocation10 + $0x258] sm:$0xff]
    %v416 = vld [vmem:[#allocation10 + $0x260] sm:$0xff]
    %v417 = vld [vmem:[#allocation10 + $0x268] sm:$0xff]
    %v418 = vld [vmem:[#allocation10 + $0x270] sm:$0xff]
    %v419 = vld [vmem:[#allocation10 + $0x278] sm:$0xff]
    %v420 = vld [vmem:[#allocation10 + $0x280] sm:$0xff]
    %v421 = vld [vmem:[#allocation10 + $0x288] sm:$0xff]
    %v422 = vld [vmem:[#allocation10 + $0x290] sm:$0xff]
    %v423 = vld [vmem:[#allocation10 + $0x298] sm:$0xff]
    %v424 = vld [vmem:[#allocation10 + $0x2a0] sm:$0xff]
    %v425 = vld [vmem:[#allocation10 + $0x2a8] sm:$0xff]
    %v426 = vld [vmem:[#allocation10 + $0x2b0] sm:$0xff]
    %v427 = vld [vmem:[#allocation10 + $0x2b8] sm:$0xff]
    %v428 = vld [vmem:[#allocation10 + $0x2c0] sm:$0xff]
    %v429 = vld [vmem:[#allocation10 + $0x2c8] sm:$0xff]
    %v430 = vld [vmem:[#allocation10 + $0x2d0] sm:$0xff]
    %v431 = vld [vmem:[#allocation10 + $0x2d8] sm:$0xff]
    %v432 = vld [vmem:[#allocation10 + $0x2e0] sm:$0xff]
    %v433 = vld [vmem:[#allocation10 + $0x2e8] sm:$0xff]
    %v434 = vld [vmem:[#allocation10 + $0x2f0] sm:$0xff]
    %v435 = vld [vmem:[#allocation10 + $0x2f8] sm:$0xff]
    %v436 = vld [vmem:[#allocation10 + $0x300] sm:$0xff]
    %v437 = vld [vmem:[#allocation10 + $0x308] sm:$0xff]
    %v438 = vld [vmem:[#allocation10 + $0x310] sm:$0xff]
    %v439 = vld [vmem:[#allocation10 + $0x318] sm:$0xff]
    %v440 = vld [vmem:[#allocation10 + $0x320] sm:$0xff]
    %v441 = vld [vmem:[#allocation10 + $0x328] sm:$0xff]
    %v442 = vld [vmem:[#allocation10 + $0x330] sm:$0xff]
    %v443 = vld [vmem:[#allocation10 + $0x338] sm:$0xff]
    %v444 = vld [vmem:[#allocation10 + $0x340] sm:$0xff]
    %v445 = vld [vmem:[#allocation10 + $0x348] sm:$0xff]
    %v446 = vld [vmem:[#allocation10 + $0x350] sm:$0xff]
    %v447 = vld [vmem:[#allocation10 + $0x358] sm:$0xff]
    %v448 = vld [vmem:[#allocation10 + $0x360] sm:$0xff]
    %v449 = vld [vmem:[#allocation10 + $0x368] sm:$0xff]
    %v450 = vld [vmem:[#allocation10 + $0x370] sm:$0xff]
    %v451 = vld [vmem:[#allocation10 + $0x378] sm:$0xff]
    %v452 = vld [vmem:[#allocation10 + $0x380] sm:$0xff]
    %v453 = vld [vmem:[#allocation10 + $0x388] sm:$0xff]
    %v454 = vld [vmem:[#allocation10 + $0x390] sm:$0xff]
    %v455 = vld [vmem:[#allocation10 + $0x398] sm:$0xff]
    %v456 = vld [vmem:[#allocation10 + $0x3a0] sm:$0xff]
    %v457 = vld [vmem:[#allocation10 + $0x3a8] sm:$0xff]
    %v458 = vld [vmem:[#allocation10 + $0x3b0] sm:$0xff]
    %v459 = vld [vmem:[#allocation10 + $0x3b8] sm:$0xff]
    %v460 = vld [vmem:[#allocation10 + $0x3c0] sm:$0xff]
    %v461 = vld [vmem:[#allocation10 + $0x3c8] sm:$0xff]
    %v462 = vld [vmem:[#allocation10 + $0x3d0] sm:$0xff]
    %v463 = vld [vmem:[#allocation10 + $0x3d8] sm:$0xff]
    %v464 = vld [vmem:[#allocation10 + $0x3e0] sm:$0xff]
    %v465 = vld [vmem:[#allocation10 + $0x3e8] sm:$0xff]
    %v466 = vld [vmem:[#allocation10 + $0x3f0] sm:$0xff]
    %v467 = vld [vmem:[#allocation10 + $0x3f8] sm:$0xff]
    %v468 = vld [vmem:[#allocation10 + $0x400] sm:$0xff]
    %v469 = vld [vmem:[#allocation10 + $0x408] sm:$0xff]
    %v470 = vld [vmem:[#allocation10 + $0x410] sm:$0xff]
    %v471 = vld [vmem:[#allocation10 + $0x418] sm:$0xff]
    %v472 = vld [vmem:[#allocation10 + $0x420] sm:$0xff]
    %v473 = vld [vmem:[#allocation10 + $0x428] sm:$0xff]
    %v474 = vld [vmem:[#allocation10 + $0x430] sm:$0xff]
    %v475 = vld [vmem:[#allocation10 + $0x438] sm:$0xff]
    %v476 = vld [vmem:[#allocation10 + $0x440] sm:$0xff]
    %v477 = vld [vmem:[#allocation10 + $0x448] sm:$0xff]
    %v478 = vld [vmem:[#allocation10 + $0x450] sm:$0xff]
    %v479 = vld [vmem:[#allocation10 + $0x458] sm:$0xff]
    %v480 = vld [vmem:[#allocation10 + $0x460] sm:$0xff]
    %v481 = vld [vmem:[#allocation10 + $0x468] sm:$0xff]
    %v482 = vld [vmem:[#allocation10 + $0x470] sm:$0xff]
    %v483 = vld [vmem:[#allocation10 + $0x478] sm:$0xff]
    %v484 = vld [vmem:[#allocation10 + $0x480] sm:$0xff]
    %v485 = vld [vmem:[#allocation10 + $0x488] sm:$0xff]
    %v486 = vld [vmem:[#allocation10 + $0x490] sm:$0xff]
    %v487 = vld [vmem:[#allocation10 + $0x498] sm:$0xff]
    %v488 = vld [vmem:[#allocation10 + $0x4a0] sm:$0xff]
    %v489 = vld [vmem:[#allocation10 + $0x4a8] sm:$0xff]
    %v490 = vld [vmem:[#allocation10 + $0x4b0] sm:$0xff]
    %v491 = vld [vmem:[#allocation10 + $0x4b8] sm:$0xff]
    %v492 = vld [vmem:[#allocation10 + $0x4c0] sm:$0xff]
    %v493 = vld [vmem:[#allocation10 + $0x4c8] sm:$0xff]
    %v494 = vld [vmem:[#allocation10 + $0x4d0] sm:$0xff]
    %v495 = vld [vmem:[#allocation10 + $0x4d8] sm:$0xff]
    %v496 = vld [vmem:[#allocation10 + $0x4e0] sm:$0xff]
    %v497 = vld [vmem:[#allocation10 + $0x4e8] sm:$0xff]
    %v498 = vld [vmem:[#allocation10 + $0x4f0] sm:$0xff]
    %v499 = vld [vmem:[#allocation10 + $0x4f8] sm:$0xff]
    %v500 = vld [vmem:[#allocation10 + $0x500] sm:$0xff]
    %v501 = vld [vmem:[#allocation10 + $0x508] sm:$0xff]
    %v502 = vld [vmem:[#allocation10 + $0x510] sm:$0xff]
    %v503 = vld [vmem:[#allocation10 + $0x518] sm:$0xff]
    %v504 = vld [vmem:[#allocation10 + $0x520] sm:$0xff]
    %v505 = vld [vmem:[#allocation10 + $0x528] sm:$0xff]
    %v506 = vld [vmem:[#allocation10 + $0x530] sm:$0xff]
    %v507 = vld [vmem:[#allocation10 + $0x538] sm:$0xff]
    %v508 = vld [vmem:[#allocation10 + $0x540] sm:$0xff]
    %v509 = vld [vmem:[#allocation10 + $0x548] sm:$0xff]
    %v510 = vld [vmem:[#allocation10 + $0x550] sm:$0xff]
    %v511 = vld [vmem:[#allocation10 + $0x558] sm:$0xff]
    %v512 = vld [vmem:[#allocation10 + $0x560] sm:$0xff]
    %v513 = vld [vmem:[#allocation10 + $0x568] sm:$0xff]
    %v514 = vld [vmem:[#allocation10 + $0x570] sm:$0xff]
    %v515 = vld [vmem:[#allocation10 + $0x578] sm:$0xff]
    %v516 = vld [vmem:[#allocation10 + $0x580] sm:$0xff]
    %v517 = vld [vmem:[#allocation10 + $0x588] sm:$0xff]
    %v518 = vld [vmem:[#allocation10 + $0x590] sm:$0xff]
    %v519 = vld [vmem:[#allocation10 + $0x598] sm:$0xff]
    %v520 = vld [vmem:[#allocation10 + $0x5a0] sm:$0xff]
    %v521 = vld [vmem:[#allocation10 + $0x5a8] sm:$0xff]
    %v522 = vld [vmem:[#allocation10 + $0x5b0] sm:$0xff]
    %v523 = vld [vmem:[#allocation10 + $0x5b8] sm:$0xff]
    %v524 = vld [vmem:[#allocation10 + $0x5c0] sm:$0xff]
    %v525 = vld [vmem:[#allocation10 + $0x5c8] sm:$0xff]
    %v526 = vld [vmem:[#allocation10 + $0x5d0] sm:$0xff]
    %v527 = vld [vmem:[#allocation10 + $0x5d8] sm:$0xff]
    %v528 = vld [vmem:[#allocation10 + $0x5e0] sm:$0xff]
    %v529 = vld [vmem:[#allocation10 + $0x5e8] sm:$0xff]
    %v530 = vld [vmem:[#allocation10 + $0x5f0] sm:$0xff]
    %v531 = vld [vmem:[#allocation10 + $0x5f8] sm:$0xff]
    %v532 = vld [vmem:[#allocation10 + $0x600] sm:$0xff]
    %v533 = vld [vmem:[#allocation10 + $0x608] sm:$0xff]
    %v534 = vld [vmem:[#allocation10 + $0x610] sm:$0xff]
    %v535 = vld [vmem:[#allocation10 + $0x618] sm:$0xff]
    %v536 = vld [vmem:[#allocation10 + $0x620] sm:$0xff]
    %v537 = vld [vmem:[#allocation10 + $0x628] sm:$0xff]
    %v538 = vld [vmem:[#allocation10 + $0x630] sm:$0xff]
    %v539 = vld [vmem:[#allocation10 + $0x638] sm:$0xff]
    %v540 = vld [vmem:[#allocation10 + $0x640] sm:$0xff]
    %v541 = vld [vmem:[#allocation10 + $0x648] sm:$0xff]
    %v542 = vld [vmem:[#allocation10 + $0x650] sm:$0xff]
    %v543 = vld [vmem:[#allocation10 + $0x658] sm:$0xff]
    %v544 = vld [vmem:[#allocation10 + $0x660] sm:$0xff]
    %v545 = vld [vmem:[#allocation10 + $0x668] sm:$0xff]
    %v546 = vld [vmem:[#allocation10 + $0x670] sm:$0xff]
    %v547 = vld [vmem:[#allocation10 + $0x678] sm:$0xff]
    %v548 = vld [vmem:[#allocation10 + $0x680] sm:$0xff]
    %v549 = vld [vmem:[#allocation10 + $0x688] sm:$0xff]
    %v550 = vld [vmem:[#allocation10 + $0x690] sm:$0xff]
    %v551 = vld [vmem:[#allocation10 + $0x698] sm:$0xff]
    %v552 = vld [vmem:[#allocation10 + $0x6a0] sm:$0xff]
    %v553 = vld [vmem:[#allocation10 + $0x6a8] sm:$0xff]
    %v554 = vld [vmem:[#allocation10 + $0x6b0] sm:$0xff]
    %v555 = vld [vmem:[#allocation10 + $0x6b8] sm:$0xff]
    %v556 = vld [vmem:[#allocation10 + $0x6c0] sm:$0xff]
    %v557 = vld [vmem:[#allocation10 + $0x6c8] sm:$0xff]
    %v558 = vld [vmem:[#allocation10 + $0x6d0] sm:$0xff]
    %v559 = vld [vmem:[#allocation10 + $0x6d8] sm:$0xff]
    %v560 = vld [vmem:[#allocation10 + $0x6e0] sm:$0xff]
    %v561 = vld [vmem:[#allocation10 + $0x6e8] sm:$0xff]
    %v562 = vld [vmem:[#allocation10 + $0x6f0] sm:$0xff]
    %v563 = vld [vmem:[#allocation10 + $0x6f8] sm:$0xff]
    %v564 = vld [vmem:[#allocation10 + $0x700] sm:$0xff]
    %v565 = vld [vmem:[#allocation10 + $0x708] sm:$0xff]
    %v566 = vld [vmem:[#allocation10 + $0x710] sm:$0xff]
    %v567 = vld [vmem:[#allocation10 + $0x718] sm:$0xff]
    %v568 = vld [vmem:[#allocation10 + $0x720] sm:$0xff]
    %v569 = vld [vmem:[#allocation10 + $0x728] sm:$0xff]
    %v570 = vld [vmem:[#allocation10 + $0x730] sm:$0xff]
    %v571 = vld [vmem:[#allocation10 + $0x738] sm:$0xff]
    %v572 = vld [vmem:[#allocation10 + $0x740] sm:$0xff]
    %v573 = vld [vmem:[#allocation10 + $0x748] sm:$0xff]
    %v574 = vld [vmem:[#allocation10 + $0x750] sm:$0xff]
    %v575 = vld [vmem:[#allocation10 + $0x758] sm:$0xff]
    %v576 = vld [vmem:[#allocation10 + $0x760] sm:$0xff]
    %v577 = vld [vmem:[#allocation10 + $0x768] sm:$0xff]
    %v578 = vld [vmem:[#allocation10 + $0x770] sm:$0xff]
    %v579 = vld [vmem:[#allocation10 + $0x778] sm:$0xff]
    %v580 = vld [vmem:[#allocation10 + $0x780] sm:$0xff]
    %v581 = vld [vmem:[#allocation10 + $0x788] sm:$0xff]
    %v582 = vld [vmem:[#allocation10 + $0x790] sm:$0xff]
    %v583 = vld [vmem:[#allocation10 + $0x798] sm:$0xff]
    %v584 = vld [vmem:[#allocation10 + $0x7a0] sm:$0xff]
    %v585 = vld [vmem:[#allocation10 + $0x7a8] sm:$0xff]
    %v586 = vld [vmem:[#allocation10 + $0x7b0] sm:$0xff]
    %v587 = vld [vmem:[#allocation10 + $0x7b8] sm:$0xff]
    %v588 = vld [vmem:[#allocation10 + $0x7c0] sm:$0xff]
    %v589 = vld [vmem:[#allocation10 + $0x7c8] sm:$0xff]
    %v590 = vld [vmem:[#allocation10 + $0x7d0] sm:$0xff]
    %v591 = vld [vmem:[#allocation10 + $0x7d8] sm:$0xff]
    %v592 = vld [vmem:[#allocation10 + $0x7e0] sm:$0xff]
    %v593 = vld [vmem:[#allocation10 + $0x7e8] sm:$0xff]
    %v594 = vld [vmem:[#allocation10 + $0x7f0] sm:$0xff]
    %v595 = vld [vmem:[#allocation10 + $0x7f8] sm:$0xff]
    %v596 = vld [vmem:[#allocation10 + $0x800] sm:$0xff]
    %v597 = vld [vmem:[#allocation10 + $0x808] sm:$0xff]
    %v598 = vld [vmem:[#allocation10 + $0x810] sm:$0xff]
    %v599 = vld [vmem:[#allocation10 + $0x818] sm:$0xff]
    %v600 = vld [vmem:[#allocation10 + $0x820] sm:$0xff]
    %v601 = vld [vmem:[#allocation10 + $0x828] sm:$0xff]
    %v602 = vld [vmem:[#allocation10 + $0x830] sm:$0xff]
    %v603 = vld [vmem:[#allocation10 + $0x838] sm:$0xff]
    %v604 = vld [vmem:[#allocation10 + $0x840] sm:$0xff]
    %v605 = vld [vmem:[#allocation10 + $0x848] sm:$0xff]
    %v606 = vld [vmem:[#allocation10 + $0x850] sm:$0xff]
    %v607 = vld [vmem:[#allocation10 + $0x858] sm:$0xff]
    %v608 = vld [vmem:[#allocation10 + $0x860] sm:$0xff]
    %v609 = vld [vmem:[#allocation10 + $0x868] sm:$0xff]
    %v610 = vld [vmem:[#allocation10 + $0x870] sm:$0xff]
    %v611 = vld [vmem:[#allocation10 + $0x878] sm:$0xff]
    %v612 = vld [vmem:[#allocation10 + $0x880] sm:$0xff]
    %v613 = vld [vmem:[#allocation10 + $0x888] sm:$0xff]
    %v614 = vld [vmem:[#allocation10 + $0x890] sm:$0xff]
    %v615 = vld [vmem:[#allocation10 + $0x898] sm:$0xff]
    %v616 = vld [vmem:[#allocation10 + $0x8a0] sm:$0xff]
    %v617 = vld [vmem:[#allocation10 + $0x8a8] sm:$0xff]
    %v618 = vld [vmem:[#allocation10 + $0x8b0] sm:$0xff]
    %v619 = vld [vmem:[#allocation10 + $0x8b8] sm:$0xff]
    %v620 = vld [vmem:[#allocation10 + $0x8c0] sm:$0xff]
    %v621 = vld [vmem:[#allocation10 + $0x8c8] sm:$0xff]
    %v622 = vld [vmem:[#allocation10 + $0x8d0] sm:$0xff]
    %v623 = vld [vmem:[#allocation10 + $0x8d8] sm:$0xff]
    %v624 = vld [vmem:[#allocation10 + $0x8e0] sm:$0xff]
    %v625 = vld [vmem:[#allocation10 + $0x8e8] sm:$0xff]
    %v626 = vld [vmem:[#allocation10 + $0x8f0] sm:$0xff]
    %v627 = vld [vmem:[#allocation10 + $0x8f8] sm:$0xff]
    %v628 = vld [vmem:[#allocation11] sm:$0x3]
    %v630 = vperm.slane %v628, 0
    %v631 = vperm.slane %v628, 1
    %v643 = vunpack.c.l.b16 %v331
    %v644 = vunpack.c.h.b16 %v331
    %v645 = vunpack.c.l.b16 %v332
    %v646 = vunpack.c.h.b16 %v332
    %v647 = vunpack.c.l.b16 %v333
    %v648 = vunpack.c.h.b16 %v333
    %v649 = vunpack.c.l.b16 %v334
    %v650 = vunpack.c.h.b16 %v334
    %v651 = vunpack.c.l.b16 %v335
    %v652 = vunpack.c.h.b16 %v335
    %v653 = vunpack.c.l.b16 %v336
    %v654 = vunpack.c.h.b16 %v336
    %v655 = vunpack.c.l.b16 %v337
    %v656 = vunpack.c.h.b16 %v337
    %v657 = vunpack.c.l.b16 %v338
    %v658 = vunpack.c.h.b16 %v338
    %v659 = vunpack.c.l.b16 %v339
    %v660 = vunpack.c.h.b16 %v339
    %v661 = vpack.c.b16 %v643, %v643
    %v662 = vpack.c.b16 %v644, %v644
    %v663 = vpack.c.b16 %v645, %v645
    %v664 = vpack.c.b16 %v646, %v646
    %v665 = vpack.c.b16 %v647, %v647
    %v666 = vpack.c.b16 %v648, %v648
    %v667 = vpack.c.b16 %v649, %v649
    %v668 = vpack.c.b16 %v650, %v650
    %v669 = vpack.c.b16 %v651, %v651
    %v670 = vpack.c.b16 %v652, %v652
    %v671 = vpack.c.b16 %v653, %v653
    %v672 = vpack.c.b16 %v654, %v654
    %v673 = vpack.c.b16 %v655, %v655
    %v674 = vpack.c.b16 %v656, %v656
    %v675 = vpack.c.b16 %v657, %v657
    %v676 = vpack.c.b16 %v658, %v658
    %v677 = vpack.c.b16 %v659, %v659
    %v678 = vpack.c.b16 %v660, %v660
    %v985 = vunpack.c.l.b16 %v340
    %v986 = vunpack.c.h.b16 %v340
    %v987 = vunpack.c.l.b16 %v341
    %v988 = vunpack.c.h.b16 %v341
    %v989 = vunpack.c.l.b16 %v342
    %v990 = vunpack.c.h.b16 %v342
    %v991 = vunpack.c.l.b16 %v343
    %v992 = vunpack.c.h.b16 %v343
    %v993 = vunpack.c.l.b16 %v344
    %v994 = vunpack.c.h.b16 %v344
    %v995 = vunpack.c.l.b16 %v345
    %v996 = vunpack.c.h.b16 %v345
    %v997 = vunpack.c.l.b16 %v346
    %v998 = vunpack.c.h.b16 %v346
    %v999 = vunpack.c.l.b16 %v347
    %v1000 = vunpack.c.h.b16 %v347
    %v1001 = vunpack.c.l.b16 %v348
    %v1002 = vunpack.c.h.b16 %v348
    %v1003 = vunpack.c.l.b16 %v349
    %v1004 = vunpack.c.h.b16 %v349
    %v1005 = vunpack.c.l.b16 %v350
    %v1006 = vunpack.c.h.b16 %v350
    %v1007 = vunpack.c.l.b16 %v351
    %v1008 = vunpack.c.h.b16 %v351
    %v1009 = vunpack.c.l.b16 %v352
    %v1010 = vunpack.c.h.b16 %v352
    %v1011 = vunpack.c.l.b16 %v353
    %v1012 = vunpack.c.h.b16 %v353
    %v1013 = vunpack.c.l.b16 %v354
    %v1014 = vunpack.c.h.b16 %v354
    %v1015 = vunpack.c.l.b16 %v355
    %v1016 = vunpack.c.h.b16 %v355
    %v1017 = vunpack.c.l.b16 %v356
    %v1018 = vunpack.c.h.b16 %v356
    %v1019 = vunpack.c.l.b16 %v357
    %v1020 = vunpack.c.h.b16 %v357
    %v1021 = vunpack.c.l.b16 %v358
    %v1022 = vunpack.c.h.b16 %v358
    %v1023 = vunpack.c.l.b16 %v359
    %v1024 = vunpack.c.h.b16 %v359
    %v1025 = vunpack.c.l.b16 %v360
    %v1026 = vunpack.c.h.b16 %v360
    %v1027 = vunpack.c.l.b16 %v361
    %v1028 = vunpack.c.h.b16 %v361
    %v1029 = vunpack.c.l.b16 %v362
    %v1030 = vunpack.c.h.b16 %v362
    %v1031 = vunpack.c.l.b16 %v363
    %v1032 = vunpack.c.h.b16 %v363
    %v1033 = vunpack.c.l.b16 %v364
    %v1034 = vunpack.c.h.b16 %v364
    %v1035 = vunpack.c.l.b16 %v365
    %v1036 = vunpack.c.h.b16 %v365
    %v1037 = vunpack.c.l.b16 %v366
    %v1038 = vunpack.c.h.b16 %v366
    %v1039 = vunpack.c.l.b16 %v367
    %v1040 = vunpack.c.h.b16 %v367
    %v1041 = vunpack.c.l.b16 %v368
    %v1042 = vunpack.c.h.b16 %v368
    %v1043 = vunpack.c.l.b16 %v369
    %v1044 = vunpack.c.h.b16 %v369
    %v1045 = vunpack.c.l.b16 %v370
    %v1046 = vunpack.c.h.b16 %v370
    %v1047 = vunpack.c.l.b16 %v371
    %v1048 = vunpack.c.h.b16 %v371
    %v1049 = vunpack.c.l.b16 %v372
    %v1050 = vunpack.c.h.b16 %v372
    %v1051 = vunpack.c.l.b16 %v373
    %v1052 = vunpack.c.h.b16 %v373
    %v1053 = vunpack.c.l.b16 %v374
    %v1054 = vunpack.c.h.b16 %v374
    %v1055 = vunpack.c.l.b16 %v375
    %v1056 = vunpack.c.h.b16 %v375
    %v1057 = vunpack.c.l.b16 %v376
    %v1058 = vunpack.c.h.b16 %v376
    %v1059 = vunpack.c.l.b16 %v377
    %v1060 = vunpack.c.h.b16 %v377
    %v1061 = vunpack.c.l.b16 %v378
    %v1062 = vunpack.c.h.b16 %v378
    %v1063 = vunpack.c.l.b16 %v379
    %v1064 = vunpack.c.h.b16 %v379
    %v1065 = vunpack.c.l.b16 %v380
    %v1066 = vunpack.c.h.b16 %v380
    %v1067 = vunpack.c.l.b16 %v381
    %v1068 = vunpack.c.h.b16 %v381
    %v1069 = vunpack.c.l.b16 %v382
    %v1070 = vunpack.c.h.b16 %v382
    %v1071 = vunpack.c.l.b16 %v383
    %v1072 = vunpack.c.h.b16 %v383
    %v1073 = vunpack.c.l.b16 %v384
    %v1074 = vunpack.c.h.b16 %v384
    %v1075 = vunpack.c.l.b16 %v385
    %v1076 = vunpack.c.h.b16 %v385
    %v1077 = vunpack.c.l.b16 %v386
    %v1078 = vunpack.c.h.b16 %v386
    %v1079 = vunpack.c.l.b16 %v387
    %v1080 = vunpack.c.h.b16 %v387
    %v1081 = vunpack.c.l.b16 %v388
    %v1082 = vunpack.c.h.b16 %v388
    %v1083 = vunpack.c.l.b16 %v389
    %v1084 = vunpack.c.h.b16 %v389
    %v1085 = vunpack.c.l.b16 %v390
    %v1086 = vunpack.c.h.b16 %v390
    %v1087 = vunpack.c.l.b16 %v391
    %v1088 = vunpack.c.h.b16 %v391
    %v1089 = vunpack.c.l.b16 %v392
    %v1090 = vunpack.c.h.b16 %v392
    %v1091 = vunpack.c.l.b16 %v393
    %v1092 = vunpack.c.h.b16 %v393
    %v1093 = vunpack.c.l.b16 %v394
    %v1094 = vunpack.c.h.b16 %v394
    %v1095 = vunpack.c.l.b16 %v395
    %v1096 = vunpack.c.h.b16 %v395
    %v1097 = vunpack.c.l.b16 %v396
    %v1098 = vunpack.c.h.b16 %v396
    %v1099 = vunpack.c.l.b16 %v397
    %v1100 = vunpack.c.h.b16 %v397
    %v1101 = vunpack.c.l.b16 %v398
    %v1102 = vunpack.c.h.b16 %v398
    %v1103 = vunpack.c.l.b16 %v399
    %v1104 = vunpack.c.h.b16 %v399
    %v1105 = vunpack.c.l.b16 %v400
    %v1106 = vunpack.c.h.b16 %v400
    %v1107 = vunpack.c.l.b16 %v401
    %v1108 = vunpack.c.h.b16 %v401
    %v1109 = vunpack.c.l.b16 %v402
    %v1110 = vunpack.c.h.b16 %v402
    %v1111 = vunpack.c.l.b16 %v403
    %v1112 = vunpack.c.h.b16 %v403
    %v1113 = vunpack.c.l.b16 %v404
    %v1114 = vunpack.c.h.b16 %v404
    %v1115 = vunpack.c.l.b16 %v405
    %v1116 = vunpack.c.h.b16 %v405
    %v1117 = vunpack.c.l.b16 %v406
    %v1118 = vunpack.c.h.b16 %v406
    %v1119 = vunpack.c.l.b16 %v407
    %v1120 = vunpack.c.h.b16 %v407
    %v1121 = vunpack.c.l.b16 %v408
    %v1122 = vunpack.c.h.b16 %v408
    %v1123 = vunpack.c.l.b16 %v409
    %v1124 = vunpack.c.h.b16 %v409
    %v1125 = vunpack.c.l.b16 %v410
    %v1126 = vunpack.c.h.b16 %v410
    %v1127 = vunpack.c.l.b16 %v411
    %v1128 = vunpack.c.h.b16 %v411
    %v1129 = vunpack.c.l.b16 %v412
    %v1130 = vunpack.c.h.b16 %v412
    %v1131 = vunpack.c.l.b16 %v413
    %v1132 = vunpack.c.h.b16 %v413
    %v1133 = vunpack.c.l.b16 %v414
    %v1134 = vunpack.c.h.b16 %v414
    %v1135 = vunpack.c.l.b16 %v415
    %v1136 = vunpack.c.h.b16 %v415
    %v1137 = vunpack.c.l.b16 %v416
    %v1138 = vunpack.c.h.b16 %v416
    %v1139 = vunpack.c.l.b16 %v417
    %v1140 = vunpack.c.h.b16 %v417
    %v1141 = vunpack.c.l.b16 %v418
    %v1142 = vunpack.c.h.b16 %v418
    %v1143 = vunpack.c.l.b16 %v419
    %v1144 = vunpack.c.h.b16 %v419
    %v1145 = vunpack.c.l.b16 %v420
    %v1146 = vunpack.c.h.b16 %v420
    %v1147 = vunpack.c.l.b16 %v421
    %v1148 = vunpack.c.h.b16 %v421
    %v1149 = vunpack.c.l.b16 %v422
    %v1150 = vunpack.c.h.b16 %v422
    %v1151 = vunpack.c.l.b16 %v423
    %v1152 = vunpack.c.h.b16 %v423
    %v1153 = vunpack.c.l.b16 %v424
    %v1154 = vunpack.c.h.b16 %v424
    %v1155 = vunpack.c.l.b16 %v425
    %v1156 = vunpack.c.h.b16 %v425
    %v1157 = vunpack.c.l.b16 %v426
    %v1158 = vunpack.c.h.b16 %v426
    %v1159 = vunpack.c.l.b16 %v427
    %v1160 = vunpack.c.h.b16 %v427
    %v1161 = vunpack.c.l.b16 %v428
    %v1162 = vunpack.c.h.b16 %v428
    %v1163 = vunpack.c.l.b16 %v429
    %v1164 = vunpack.c.h.b16 %v429
    %v1165 = vunpack.c.l.b16 %v430
    %v1166 = vunpack.c.h.b16 %v430
    %v1167 = vunpack.c.l.b16 %v431
    %v1168 = vunpack.c.h.b16 %v431
    %v1169 = vunpack.c.l.b16 %v432
    %v1170 = vunpack.c.h.b16 %v432
    %v1171 = vunpack.c.l.b16 %v433
    %v1172 = vunpack.c.h.b16 %v433
    %v1173 = vunpack.c.l.b16 %v434
    %v1174 = vunpack.c.h.b16 %v434
    %v1175 = vunpack.c.l.b16 %v435
    %v1176 = vunpack.c.h.b16 %v435
    %v1177 = vunpack.c.l.b16 %v436
    %v1178 = vunpack.c.h.b16 %v436
    %v1179 = vunpack.c.l.b16 %v437
    %v1180 = vunpack.c.h.b16 %v437
    %v1181 = vunpack.c.l.b16 %v438
    %v1182 = vunpack.c.h.b16 %v438
    %v1183 = vunpack.c.l.b16 %v439
    %v1184 = vunpack.c.h.b16 %v439
    %v1185 = vunpack.c.l.b16 %v440
    %v1186 = vunpack.c.h.b16 %v440
    %v1187 = vunpack.c.l.b16 %v441
    %v1188 = vunpack.c.h.b16 %v441
    %v1189 = vunpack.c.l.b16 %v442
    %v1190 = vunpack.c.h.b16 %v442
    %v1191 = vunpack.c.l.b16 %v443
    %v1192 = vunpack.c.h.b16 %v443
    %v1193 = vunpack.c.l.b16 %v444
    %v1194 = vunpack.c.h.b16 %v444
    %v1195 = vunpack.c.l.b16 %v445
    %v1196 = vunpack.c.h.b16 %v445
    %v1197 = vunpack.c.l.b16 %v446
    %v1198 = vunpack.c.h.b16 %v446
    %v1199 = vunpack.c.l.b16 %v447
    %v1200 = vunpack.c.h.b16 %v447
    %v1201 = vunpack.c.l.b16 %v448
    %v1202 = vunpack.c.h.b16 %v448
    %v1203 = vunpack.c.l.b16 %v449
    %v1204 = vunpack.c.h.b16 %v449
    %v1205 = vunpack.c.l.b16 %v450
    %v1206 = vunpack.c.h.b16 %v450
    %v1207 = vunpack.c.l.b16 %v451
    %v1208 = vunpack.c.h.b16 %v451
    %v1209 = vunpack.c.l.b16 %v452
    %v1210 = vunpack.c.h.b16 %v452
    %v1211 = vunpack.c.l.b16 %v453
    %v1212 = vunpack.c.h.b16 %v453
    %v1213 = vunpack.c.l.b16 %v454
    %v1214 = vunpack.c.h.b16 %v454
    %v1215 = vunpack.c.l.b16 %v455
    %v1216 = vunpack.c.h.b16 %v455
    %v1217 = vunpack.c.l.b16 %v456
    %v1218 = vunpack.c.h.b16 %v456
    %v1219 = vunpack.c.l.b16 %v457
    %v1220 = vunpack.c.h.b16 %v457
    %v1221 = vunpack.c.l.b16 %v458
    %v1222 = vunpack.c.h.b16 %v458
    %v1223 = vunpack.c.l.b16 %v459
    %v1224 = vunpack.c.h.b16 %v459
    %v1225 = vunpack.c.l.b16 %v460
    %v1226 = vunpack.c.h.b16 %v460
    %v1227 = vunpack.c.l.b16 %v461
    %v1228 = vunpack.c.h.b16 %v461
    %v1229 = vunpack.c.l.b16 %v462
    %v1230 = vunpack.c.h.b16 %v462
    %v1231 = vunpack.c.l.b16 %v463
    %v1232 = vunpack.c.h.b16 %v463
    %v1233 = vunpack.c.l.b16 %v464
    %v1234 = vunpack.c.h.b16 %v464
    %v1235 = vunpack.c.l.b16 %v465
    %v1236 = vunpack.c.h.b16 %v465
    %v1237 = vunpack.c.l.b16 %v466
    %v1238 = vunpack.c.h.b16 %v466
    %v1239 = vunpack.c.l.b16 %v467
    %v1240 = vunpack.c.h.b16 %v467
    %v1241 = vunpack.c.l.b16 %v468
    %v1242 = vunpack.c.h.b16 %v468
    %v1243 = vunpack.c.l.b16 %v469
    %v1244 = vunpack.c.h.b16 %v469
    %v1245 = vunpack.c.l.b16 %v470
    %v1246 = vunpack.c.h.b16 %v470
    %v1247 = vunpack.c.l.b16 %v471
    %v1248 = vunpack.c.h.b16 %v471
    %v1249 = vunpack.c.l.b16 %v472
    %v1250 = vunpack.c.h.b16 %v472
    %v1251 = vunpack.c.l.b16 %v473
    %v1252 = vunpack.c.h.b16 %v473
    %v1253 = vunpack.c.l.b16 %v474
    %v1254 = vunpack.c.h.b16 %v474
    %v1255 = vunpack.c.l.b16 %v475
    %v1256 = vunpack.c.h.b16 %v475
    %v1257 = vunpack.c.l.b16 %v476
    %v1258 = vunpack.c.h.b16 %v476
    %v1259 = vunpack.c.l.b16 %v477
    %v1260 = vunpack.c.h.b16 %v477
    %v1261 = vunpack.c.l.b16 %v478
    %v1262 = vunpack.c.h.b16 %v478
    %v1263 = vunpack.c.l.b16 %v479
    %v1264 = vunpack.c.h.b16 %v479
    %v1265 = vunpack.c.l.b16 %v480
    %v1266 = vunpack.c.h.b16 %v480
    %v1267 = vunpack.c.l.b16 %v481
    %v1268 = vunpack.c.h.b16 %v481
    %v1269 = vunpack.c.l.b16 %v482
    %v1270 = vunpack.c.h.b16 %v482
    %v1271 = vunpack.c.l.b16 %v483
    %v1272 = vunpack.c.h.b16 %v483
    %v1273 = vunpack.c.l.b16 %v484
    %v1274 = vunpack.c.h.b16 %v484
    %v1275 = vunpack.c.l.b16 %v485
    %v1276 = vunpack.c.h.b16 %v485
    %v1277 = vunpack.c.l.b16 %v486
    %v1278 = vunpack.c.h.b16 %v486
    %v1279 = vunpack.c.l.b16 %v487
    %v1280 = vunpack.c.h.b16 %v487
    %v1281 = vunpack.c.l.b16 %v488
    %v1282 = vunpack.c.h.b16 %v488
    %v1283 = vunpack.c.l.b16 %v489
    %v1284 = vunpack.c.h.b16 %v489
    %v1285 = vunpack.c.l.b16 %v490
    %v1286 = vunpack.c.h.b16 %v490
    %v1287 = vunpack.c.l.b16 %v491
    %v1288 = vunpack.c.h.b16 %v491
    %v1289 = vunpack.c.l.b16 %v492
    %v1290 = vunpack.c.h.b16 %v492
    %v1291 = vunpack.c.l.b16 %v493
    %v1292 = vunpack.c.h.b16 %v493
    %v1293 = vunpack.c.l.b16 %v494
    %v1294 = vunpack.c.h.b16 %v494
    %v1295 = vunpack.c.l.b16 %v495
    %v1296 = vunpack.c.h.b16 %v495
    %v1297 = vunpack.c.l.b16 %v496
    %v1298 = vunpack.c.h.b16 %v496
    %v1299 = vunpack.c.l.b16 %v497
    %v1300 = vunpack.c.h.b16 %v497
    %v1301 = vunpack.c.l.b16 %v498
    %v1302 = vunpack.c.h.b16 %v498
    %v1303 = vunpack.c.l.b16 %v499
    %v1304 = vunpack.c.h.b16 %v499
    %v1305 = vunpack.c.l.b16 %v500
    %v1306 = vunpack.c.h.b16 %v500
    %v1307 = vunpack.c.l.b16 %v501
    %v1308 = vunpack.c.h.b16 %v501
    %v1309 = vunpack.c.l.b16 %v502
    %v1310 = vunpack.c.h.b16 %v502
    %v1311 = vunpack.c.l.b16 %v503
    %v1312 = vunpack.c.h.b16 %v503
    %v1313 = vunpack.c.l.b16 %v504
    %v1314 = vunpack.c.h.b16 %v504
    %v1315 = vunpack.c.l.b16 %v505
    %v1316 = vunpack.c.h.b16 %v505
    %v1317 = vunpack.c.l.b16 %v506
    %v1318 = vunpack.c.h.b16 %v506
    %v1319 = vunpack.c.l.b16 %v507
    %v1320 = vunpack.c.h.b16 %v507
    %v1321 = vunpack.c.l.b16 %v508
    %v1322 = vunpack.c.h.b16 %v508
    %v1323 = vunpack.c.l.b16 %v509
    %v1324 = vunpack.c.h.b16 %v509
    %v1325 = vunpack.c.l.b16 %v510
    %v1326 = vunpack.c.h.b16 %v510
    %v1327 = vunpack.c.l.b16 %v511
    %v1328 = vunpack.c.h.b16 %v511
    %v1329 = vunpack.c.l.b16 %v512
    %v1330 = vunpack.c.h.b16 %v512
    %v1331 = vunpack.c.l.b16 %v513
    %v1332 = vunpack.c.h.b16 %v513
    %v1333 = vunpack.c.l.b16 %v514
    %v1334 = vunpack.c.h.b16 %v514
    %v1335 = vunpack.c.l.b16 %v515
    %v1336 = vunpack.c.h.b16 %v515
    %v1337 = vunpack.c.l.b16 %v516
    %v1338 = vunpack.c.h.b16 %v516
    %v1339 = vunpack.c.l.b16 %v517
    %v1340 = vunpack.c.h.b16 %v517
    %v1341 = vunpack.c.l.b16 %v518
    %v1342 = vunpack.c.h.b16 %v518
    %v1343 = vunpack.c.l.b16 %v519
    %v1344 = vunpack.c.h.b16 %v519
    %v1345 = vunpack.c.l.b16 %v520
    %v1346 = vunpack.c.h.b16 %v520
    %v1347 = vunpack.c.l.b16 %v521
    %v1348 = vunpack.c.h.b16 %v521
    %v1349 = vunpack.c.l.b16 %v522
    %v1350 = vunpack.c.h.b16 %v522
    %v1351 = vunpack.c.l.b16 %v523
    %v1352 = vunpack.c.h.b16 %v523
    %v1353 = vunpack.c.l.b16 %v524
    %v1354 = vunpack.c.h.b16 %v524
    %v1355 = vunpack.c.l.b16 %v525
    %v1356 = vunpack.c.h.b16 %v525
    %v1357 = vunpack.c.l.b16 %v526
    %v1358 = vunpack.c.h.b16 %v526
    %v1359 = vunpack.c.l.b16 %v527
    %v1360 = vunpack.c.h.b16 %v527
    %v1361 = vunpack.c.l.b16 %v528
    %v1362 = vunpack.c.h.b16 %v528
    %v1363 = vunpack.c.l.b16 %v529
    %v1364 = vunpack.c.h.b16 %v529
    %v1365 = vunpack.c.l.b16 %v530
    %v1366 = vunpack.c.h.b16 %v530
    %v1367 = vunpack.c.l.b16 %v531
    %v1368 = vunpack.c.h.b16 %v531
    %v1369 = vunpack.c.l.b16 %v532
    %v1370 = vunpack.c.h.b16 %v532
    %v1371 = vunpack.c.l.b16 %v533
    %v1372 = vunpack.c.h.b16 %v533
    %v1373 = vunpack.c.l.b16 %v534
    %v1374 = vunpack.c.h.b16 %v534
    %v1375 = vunpack.c.l.b16 %v535
    %v1376 = vunpack.c.h.b16 %v535
    %v1377 = vunpack.c.l.b16 %v536
    %v1378 = vunpack.c.h.b16 %v536
    %v1379 = vunpack.c.l.b16 %v537
    %v1380 = vunpack.c.h.b16 %v537
    %v1381 = vunpack.c.l.b16 %v538
    %v1382 = vunpack.c.h.b16 %v538
    %v1383 = vunpack.c.l.b16 %v539
    %v1384 = vunpack.c.h.b16 %v539
    %v1385 = vunpack.c.l.b16 %v540
    %v1386 = vunpack.c.h.b16 %v540
    %v1387 = vunpack.c.l.b16 %v541
    %v1388 = vunpack.c.h.b16 %v541
    %v1389 = vunpack.c.l.b16 %v542
    %v1390 = vunpack.c.h.b16 %v542
    %v1391 = vunpack.c.l.b16 %v543
    %v1392 = vunpack.c.h.b16 %v543
    %v1393 = vunpack.c.l.b16 %v544
    %v1394 = vunpack.c.h.b16 %v544
    %v1395 = vunpack.c.l.b16 %v545
    %v1396 = vunpack.c.h.b16 %v545
    %v1397 = vunpack.c.l.b16 %v546
    %v1398 = vunpack.c.h.b16 %v546
    %v1399 = vunpack.c.l.b16 %v547
    %v1400 = vunpack.c.h.b16 %v547
    %v1401 = vunpack.c.l.b16 %v548
    %v1402 = vunpack.c.h.b16 %v548
    %v1403 = vunpack.c.l.b16 %v549
    %v1404 = vunpack.c.h.b16 %v549
    %v1405 = vunpack.c.l.b16 %v550
    %v1406 = vunpack.c.h.b16 %v550
    %v1407 = vunpack.c.l.b16 %v551
    %v1408 = vunpack.c.h.b16 %v551
    %v1409 = vunpack.c.l.b16 %v552
    %v1410 = vunpack.c.h.b16 %v552
    %v1411 = vunpack.c.l.b16 %v553
    %v1412 = vunpack.c.h.b16 %v553
    %v1413 = vunpack.c.l.b16 %v554
    %v1414 = vunpack.c.h.b16 %v554
    %v1415 = vunpack.c.l.b16 %v555
    %v1416 = vunpack.c.h.b16 %v555
    %v1417 = vunpack.c.l.b16 %v556
    %v1418 = vunpack.c.h.b16 %v556
    %v1419 = vunpack.c.l.b16 %v557
    %v1420 = vunpack.c.h.b16 %v557
    %v1421 = vunpack.c.l.b16 %v558
    %v1422 = vunpack.c.h.b16 %v558
    %v1423 = vunpack.c.l.b16 %v559
    %v1424 = vunpack.c.h.b16 %v559
    %v1425 = vunpack.c.l.b16 %v560
    %v1426 = vunpack.c.h.b16 %v560
    %v1427 = vunpack.c.l.b16 %v561
    %v1428 = vunpack.c.h.b16 %v561
    %v1429 = vunpack.c.l.b16 %v562
    %v1430 = vunpack.c.h.b16 %v562
    %v1431 = vunpack.c.l.b16 %v563
    %v1432 = vunpack.c.h.b16 %v563
    %v1433 = vunpack.c.l.b16 %v564
    %v1434 = vunpack.c.h.b16 %v564
    %v1435 = vunpack.c.l.b16 %v565
    %v1436 = vunpack.c.h.b16 %v565
    %v1437 = vunpack.c.l.b16 %v566
    %v1438 = vunpack.c.h.b16 %v566
    %v1439 = vunpack.c.l.b16 %v567
    %v1440 = vunpack.c.h.b16 %v567
    %v1441 = vunpack.c.l.b16 %v568
    %v1442 = vunpack.c.h.b16 %v568
    %v1443 = vunpack.c.l.b16 %v569
    %v1444 = vunpack.c.h.b16 %v569
    %v1445 = vunpack.c.l.b16 %v570
    %v1446 = vunpack.c.h.b16 %v570
    %v1447 = vunpack.c.l.b16 %v571
    %v1448 = vunpack.c.h.b16 %v571
    %v1449 = vunpack.c.l.b16 %v572
    %v1450 = vunpack.c.h.b16 %v572
    %v1451 = vunpack.c.l.b16 %v573
    %v1452 = vunpack.c.h.b16 %v573
    %v1453 = vunpack.c.l.b16 %v574
    %v1454 = vunpack.c.h.b16 %v574
    %v1455 = vunpack.c.l.b16 %v575
    %v1456 = vunpack.c.h.b16 %v575
    %v1457 = vunpack.c.l.b16 %v576
    %v1458 = vunpack.c.h.b16 %v576
    %v1459 = vunpack.c.l.b16 %v577
    %v1460 = vunpack.c.h.b16 %v577
    %v1461 = vunpack.c.l.b16 %v578
    %v1462 = vunpack.c.h.b16 %v578
    %v1463 = vunpack.c.l.b16 %v579
    %v1464 = vunpack.c.h.b16 %v579
    %v1465 = vunpack.c.l.b16 %v580
    %v1466 = vunpack.c.h.b16 %v580
    %v1467 = vunpack.c.l.b16 %v581
    %v1468 = vunpack.c.h.b16 %v581
    %v1469 = vunpack.c.l.b16 %v582
    %v1470 = vunpack.c.h.b16 %v582
    %v1471 = vunpack.c.l.b16 %v583
    %v1472 = vunpack.c.h.b16 %v583
    %v1473 = vunpack.c.l.b16 %v584
    %v1474 = vunpack.c.h.b16 %v584
    %v1475 = vunpack.c.l.b16 %v585
    %v1476 = vunpack.c.h.b16 %v585
    %v1477 = vunpack.c.l.b16 %v586
    %v1478 = vunpack.c.h.b16 %v586
    %v1479 = vunpack.c.l.b16 %v587
    %v1480 = vunpack.c.h.b16 %v587
    %v1481 = vunpack.c.l.b16 %v588
    %v1482 = vunpack.c.h.b16 %v588
    %v1483 = vunpack.c.l.b16 %v589
    %v1484 = vunpack.c.h.b16 %v589
    %v1485 = vunpack.c.l.b16 %v590
    %v1486 = vunpack.c.h.b16 %v590
    %v1487 = vunpack.c.l.b16 %v591
    %v1488 = vunpack.c.h.b16 %v591
    %v1489 = vunpack.c.l.b16 %v592
    %v1490 = vunpack.c.h.b16 %v592
    %v1491 = vunpack.c.l.b16 %v593
    %v1492 = vunpack.c.h.b16 %v593
    %v1493 = vunpack.c.l.b16 %v594
    %v1494 = vunpack.c.h.b16 %v594
    %v1495 = vunpack.c.l.b16 %v595
    %v1496 = vunpack.c.h.b16 %v595
    %v1497 = vunpack.c.l.b16 %v596
    %v1498 = vunpack.c.h.b16 %v596
    %v1499 = vunpack.c.l.b16 %v597
    %v1500 = vunpack.c.h.b16 %v597
    %v1501 = vunpack.c.l.b16 %v598
    %v1502 = vunpack.c.h.b16 %v598
    %v1503 = vunpack.c.l.b16 %v599
    %v1504 = vunpack.c.h.b16 %v599
    %v1505 = vunpack.c.l.b16 %v600
    %v1506 = vunpack.c.h.b16 %v600
    %v1507 = vunpack.c.l.b16 %v601
    %v1508 = vunpack.c.h.b16 %v601
    %v1509 = vunpack.c.l.b16 %v602
    %v1510 = vunpack.c.h.b16 %v602
    %v1511 = vunpack.c.l.b16 %v603
    %v1512 = vunpack.c.h.b16 %v603
    %v1513 = vunpack.c.l.b16 %v604
    %v1514 = vunpack.c.h.b16 %v604
    %v1515 = vunpack.c.l.b16 %v605
    %v1516 = vunpack.c.h.b16 %v605
    %v1517 = vunpack.c.l.b16 %v606
    %v1518 = vunpack.c.h.b16 %v606
    %v1519 = vunpack.c.l.b16 %v607
    %v1520 = vunpack.c.h.b16 %v607
    %v1521 = vunpack.c.l.b16 %v608
    %v1522 = vunpack.c.h.b16 %v608
    %v1523 = vunpack.c.l.b16 %v609
    %v1524 = vunpack.c.h.b16 %v609
    %v1525 = vunpack.c.l.b16 %v610
    %v1526 = vunpack.c.h.b16 %v610
    %v1527 = vunpack.c.l.b16 %v611
    %v1528 = vunpack.c.h.b16 %v611
    %v1529 = vunpack.c.l.b16 %v612
    %v1530 = vunpack.c.h.b16 %v612
    %v1531 = vunpack.c.l.b16 %v613
    %v1532 = vunpack.c.h.b16 %v613
    %v1533 = vunpack.c.l.b16 %v614
    %v1534 = vunpack.c.h.b16 %v614
    %v1535 = vunpack.c.l.b16 %v615
    %v1536 = vunpack.c.h.b16 %v615
    %v1537 = vunpack.c.l.b16 %v616
    %v1538 = vunpack.c.h.b16 %v616
    %v1539 = vunpack.c.l.b16 %v617
    %v1540 = vunpack.c.h.b16 %v617
    %v1541 = vunpack.c.l.b16 %v618
    %v1542 = vunpack.c.h.b16 %v618
    %v1543 = vunpack.c.l.b16 %v619
    %v1544 = vunpack.c.h.b16 %v619
    %v1545 = vunpack.c.l.b16 %v620
    %v1546 = vunpack.c.h.b16 %v620
    %v1547 = vunpack.c.l.b16 %v621
    %v1548 = vunpack.c.h.b16 %v621
    %v1549 = vunpack.c.l.b16 %v622
    %v1550 = vunpack.c.h.b16 %v622
    %v1551 = vunpack.c.l.b16 %v623
    %v1552 = vunpack.c.h.b16 %v623
    %v1553 = vunpack.c.l.b16 %v624
    %v1554 = vunpack.c.h.b16 %v624
    %v1555 = vunpack.c.l.b16 %v625
    %v1556 = vunpack.c.h.b16 %v625
    %v1557 = vunpack.c.l.b16 %v626
    %v1558 = vunpack.c.h.b16 %v626
    %v1559 = vunpack.c.l.b16 %v627
    %v1560 = vunpack.c.h.b16 %v627
    %v1561 = vpack.c.b16 %v987, %v985
    %v1562 = vpack.c.b16 %v988, %v986
    %v1563 = vpack.c.b16 %v991, %v989
    %v1564 = vpack.c.b16 %v992, %v990
    %v1565 = vpack.c.b16 %v995, %v993
    %v1566 = vpack.c.b16 %v996, %v994
    %v1567 = vpack.c.b16 %v999, %v997
    %v1568 = vpack.c.b16 %v1000, %v998
    %v1569 = vpack.c.b16 %v1003, %v1001
    %v1570 = vpack.c.b16 %v1004, %v1002
    %v1571 = vpack.c.b16 %v1007, %v1005
    %v1572 = vpack.c.b16 %v1008, %v1006
    %v1573 = vpack.c.b16 %v1011, %v1009
    %v1574 = vpack.c.b16 %v1012, %v1010
    %v1575 = vpack.c.b16 %v1015, %v1013
    %v1576 = vpack.c.b16 %v1016, %v1014
    %v1577 = vpack.c.b16 %v1019, %v1017
    %v1578 = vpack.c.b16 %v1020, %v1018
    %v1579 = vpack.c.b16 %v1023, %v1021
    %v1580 = vpack.c.b16 %v1024, %v1022
    %v1581 = vpack.c.b16 %v1027, %v1025
    %v1582 = vpack.c.b16 %v1028, %v1026
    %v1583 = vpack.c.b16 %v1031, %v1029
    %v1584 = vpack.c.b16 %v1032, %v1030
    %v1585 = vpack.c.b16 %v1035, %v1033
    %v1586 = vpack.c.b16 %v1036, %v1034
    %v1587 = vpack.c.b16 %v1039, %v1037
    %v1588 = vpack.c.b16 %v1040, %v1038
    %v1589 = vpack.c.b16 %v1043, %v1041
    %v1590 = vpack.c.b16 %v1044, %v1042
    %v1591 = vpack.c.b16 %v1047, %v1045
    %v1592 = vpack.c.b16 %v1048, %v1046
    %v1593 = vpack.c.b16 %v1051, %v1049
    %v1594 = vpack.c.b16 %v1052, %v1050
    %v1595 = vpack.c.b16 %v1055, %v1053
    %v1596 = vpack.c.b16 %v1056, %v1054
    %v1597 = vpack.c.b16 %v1059, %v1057
    %v1598 = vpack.c.b16 %v1060, %v1058
    %v1599 = vpack.c.b16 %v1063, %v1061
    %v1600 = vpack.c.b16 %v1064, %v1062
    %v1601 = vpack.c.b16 %v1067, %v1065
    %v1602 = vpack.c.b16 %v1068, %v1066
    %v1603 = vpack.c.b16 %v1071, %v1069
    %v1604 = vpack.c.b16 %v1072, %v1070
    %v1605 = vpack.c.b16 %v1075, %v1073
    %v1606 = vpack.c.b16 %v1076, %v1074
    %v1607 = vpack.c.b16 %v1079, %v1077
    %v1608 = vpack.c.b16 %v1080, %v1078
    %v1609 = vpack.c.b16 %v1083, %v1081
    %v1610 = vpack.c.b16 %v1084, %v1082
    %v1611 = vpack.c.b16 %v1087, %v1085
    %v1612 = vpack.c.b16 %v1088, %v1086
    %v1613 = vpack.c.b16 %v1091, %v1089
    %v1614 = vpack.c.b16 %v1092, %v1090
    %v1615 = vpack.c.b16 %v1095, %v1093
    %v1616 = vpack.c.b16 %v1096, %v1094
    %v1617 = vpack.c.b16 %v1099, %v1097
    %v1618 = vpack.c.b16 %v1100, %v1098
    %v1619 = vpack.c.b16 %v1103, %v1101
    %v1620 = vpack.c.b16 %v1104, %v1102
    %v1621 = vpack.c.b16 %v1107, %v1105
    %v1622 = vpack.c.b16 %v1108, %v1106
    %v1623 = vpack.c.b16 %v1111, %v1109
    %v1624 = vpack.c.b16 %v1112, %v1110
    %v1625 = vpack.c.b16 %v1115, %v1113
    %v1626 = vpack.c.b16 %v1116, %v1114
    %v1627 = vpack.c.b16 %v1119, %v1117
    %v1628 = vpack.c.b16 %v1120, %v1118
    %v1629 = vpack.c.b16 %v1123, %v1121
    %v1630 = vpack.c.b16 %v1124, %v1122
    %v1631 = vpack.c.b16 %v1127, %v1125
    %v1632 = vpack.c.b16 %v1128, %v1126
    %v1633 = vpack.c.b16 %v1131, %v1129
    %v1634 = vpack.c.b16 %v1132, %v1130
    %v1635 = vpack.c.b16 %v1135, %v1133
    %v1636 = vpack.c.b16 %v1136, %v1134
    %v1637 = vpack.c.b16 %v1139, %v1137
    %v1638 = vpack.c.b16 %v1140, %v1138
    %v1639 = vpack.c.b16 %v1143, %v1141
    %v1640 = vpack.c.b16 %v1144, %v1142
    %v1641 = vpack.c.b16 %v1147, %v1145
    %v1642 = vpack.c.b16 %v1148, %v1146
    %v1643 = vpack.c.b16 %v1151, %v1149
    %v1644 = vpack.c.b16 %v1152, %v1150
    %v1645 = vpack.c.b16 %v1155, %v1153
    %v1646 = vpack.c.b16 %v1156, %v1154
    %v1647 = vpack.c.b16 %v1159, %v1157
    %v1648 = vpack.c.b16 %v1160, %v1158
    %v1649 = vpack.c.b16 %v1163, %v1161
    %v1650 = vpack.c.b16 %v1164, %v1162
    %v1651 = vpack.c.b16 %v1167, %v1165
    %v1652 = vpack.c.b16 %v1168, %v1166
    %v1653 = vpack.c.b16 %v1171, %v1169
    %v1654 = vpack.c.b16 %v1172, %v1170
    %v1655 = vpack.c.b16 %v1175, %v1173
    %v1656 = vpack.c.b16 %v1176, %v1174
    %v1657 = vpack.c.b16 %v1179, %v1177
    %v1658 = vpack.c.b16 %v1180, %v1178
    %v1659 = vpack.c.b16 %v1183, %v1181
    %v1660 = vpack.c.b16 %v1184, %v1182
    %v1661 = vpack.c.b16 %v1187, %v1185
    %v1662 = vpack.c.b16 %v1188, %v1186
    %v1663 = vpack.c.b16 %v1191, %v1189
    %v1664 = vpack.c.b16 %v1192, %v1190
    %v1665 = vpack.c.b16 %v1195, %v1193
    %v1666 = vpack.c.b16 %v1196, %v1194
    %v1667 = vpack.c.b16 %v1199, %v1197
    %v1668 = vpack.c.b16 %v1200, %v1198
    %v1669 = vpack.c.b16 %v1203, %v1201
    %v1670 = vpack.c.b16 %v1204, %v1202
    %v1671 = vpack.c.b16 %v1207, %v1205
    %v1672 = vpack.c.b16 %v1208, %v1206
    %v1673 = vpack.c.b16 %v1211, %v1209
    %v1674 = vpack.c.b16 %v1212, %v1210
    %v1675 = vpack.c.b16 %v1215, %v1213
    %v1676 = vpack.c.b16 %v1216, %v1214
    %v1677 = vpack.c.b16 %v1219, %v1217
    %v1678 = vpack.c.b16 %v1220, %v1218
    %v1679 = vpack.c.b16 %v1223, %v1221
    %v1680 = vpack.c.b16 %v1224, %v1222
    %v1681 = vpack.c.b16 %v1227, %v1225
    %v1682 = vpack.c.b16 %v1228, %v1226
    %v1683 = vpack.c.b16 %v1231, %v1229
    %v1684 = vpack.c.b16 %v1232, %v1230
    %v1685 = vpack.c.b16 %v1235, %v1233
    %v1686 = vpack.c.b16 %v1236, %v1234
    %v1687 = vpack.c.b16 %v1239, %v1237
    %v1688 = vpack.c.b16 %v1240, %v1238
    %v1689 = vpack.c.b16 %v1243, %v1241
    %v1690 = vpack.c.b16 %v1244, %v1242
    %v1691 = vpack.c.b16 %v1247, %v1245
    %v1692 = vpack.c.b16 %v1248, %v1246
    %v1693 = vpack.c.b16 %v1251, %v1249
    %v1694 = vpack.c.b16 %v1252, %v1250
    %v1695 = vpack.c.b16 %v1255, %v1253
    %v1696 = vpack.c.b16 %v1256, %v1254
    %v1697 = vpack.c.b16 %v1259, %v1257
    %v1698 = vpack.c.b16 %v1260, %v1258
    %v1699 = vpack.c.b16 %v1263, %v1261
    %v1700 = vpack.c.b16 %v1264, %v1262
    %v1701 = vpack.c.b16 %v1267, %v1265
    %v1702 = vpack.c.b16 %v1268, %v1266
    %v1703 = vpack.c.b16 %v1271, %v1269
    %v1704 = vpack.c.b16 %v1272, %v1270
    %v1705 = vpack.c.b16 %v1275, %v1273
    %v1706 = vpack.c.b16 %v1276, %v1274
    %v1707 = vpack.c.b16 %v1279, %v1277
    %v1708 = vpack.c.b16 %v1280, %v1278
    %v1709 = vpack.c.b16 %v1283, %v1281
    %v1710 = vpack.c.b16 %v1284, %v1282
    %v1711 = vpack.c.b16 %v1287, %v1285
    %v1712 = vpack.c.b16 %v1288, %v1286
    %v1713 = vpack.c.b16 %v1291, %v1289
    %v1714 = vpack.c.b16 %v1292, %v1290
    %v1715 = vpack.c.b16 %v1295, %v1293
    %v1716 = vpack.c.b16 %v1296, %v1294
    %v1717 = vpack.c.b16 %v1299, %v1297
    %v1718 = vpack.c.b16 %v1300, %v1298
    %v1719 = vpack.c.b16 %v1303, %v1301
    %v1720 = vpack.c.b16 %v1304, %v1302
    %v1721 = vpack.c.b16 %v1307, %v1305
    %v1722 = vpack.c.b16 %v1308, %v1306
    %v1723 = vpack.c.b16 %v1311, %v1309
    %v1724 = vpack.c.b16 %v1312, %v1310
    %v1725 = vpack.c.b16 %v1315, %v1313
    %v1726 = vpack.c.b16 %v1316, %v1314
    %v1727 = vpack.c.b16 %v1319, %v1317
    %v1728 = vpack.c.b16 %v1320, %v1318
    %v1729 = vpack.c.b16 %v1323, %v1321
    %v1730 = vpack.c.b16 %v1324, %v1322
    %v1731 = vpack.c.b16 %v1327, %v1325
    %v1732 = vpack.c.b16 %v1328, %v1326
    %v1733 = vpack.c.b16 %v1331, %v1329
    %v1734 = vpack.c.b16 %v1332, %v1330
    %v1735 = vpack.c.b16 %v1335, %v1333
    %v1736 = vpack.c.b16 %v1336, %v1334
    %v1737 = vpack.c.b16 %v1339, %v1337
    %v1738 = vpack.c.b16 %v1340, %v1338
    %v1739 = vpack.c.b16 %v1343, %v1341
    %v1740 = vpack.c.b16 %v1344, %v1342
    %v1741 = vpack.c.b16 %v1347, %v1345
    %v1742 = vpack.c.b16 %v1348, %v1346
    %v1743 = vpack.c.b16 %v1351, %v1349
    %v1744 = vpack.c.b16 %v1352, %v1350
    %v1745 = vpack.c.b16 %v1355, %v1353
    %v1746 = vpack.c.b16 %v1356, %v1354
    %v1747 = vpack.c.b16 %v1359, %v1357
    %v1748 = vpack.c.b16 %v1360, %v1358
    %v1749 = vpack.c.b16 %v1363, %v1361
    %v1750 = vpack.c.b16 %v1364, %v1362
    %v1751 = vpack.c.b16 %v1367, %v1365
    %v1752 = vpack.c.b16 %v1368, %v1366
    %v1753 = vpack.c.b16 %v1371, %v1369
    %v1754 = vpack.c.b16 %v1372, %v1370
    %v1755 = vpack.c.b16 %v1375, %v1373
    %v1756 = vpack.c.b16 %v1376, %v1374
    %v1757 = vpack.c.b16 %v1379, %v1377
    %v1758 = vpack.c.b16 %v1380, %v1378
    %v1759 = vpack.c.b16 %v1383, %v1381
    %v1760 = vpack.c.b16 %v1384, %v1382
    %v1761 = vpack.c.b16 %v1387, %v1385
    %v1762 = vpack.c.b16 %v1388, %v1386
    %v1763 = vpack.c.b16 %v1391, %v1389
    %v1764 = vpack.c.b16 %v1392, %v1390
    %v1765 = vpack.c.b16 %v1395, %v1393
    %v1766 = vpack.c.b16 %v1396, %v1394
    %v1767 = vpack.c.b16 %v1399, %v1397
    %v1768 = vpack.c.b16 %v1400, %v1398
    %v1769 = vpack.c.b16 %v1403, %v1401
    %v1770 = vpack.c.b16 %v1404, %v1402
    %v1771 = vpack.c.b16 %v1407, %v1405
    %v1772 = vpack.c.b16 %v1408, %v1406
    %v1773 = vpack.c.b16 %v1411, %v1409
    %v1774 = vpack.c.b16 %v1412, %v1410
    %v1775 = vpack.c.b16 %v1415, %v1413
    %v1776 = vpack.c.b16 %v1416, %v1414
    %v1777 = vpack.c.b16 %v1419, %v1417
    %v1778 = vpack.c.b16 %v1420, %v1418
    %v1779 = vpack.c.b16 %v1423, %v1421
    %v1780 = vpack.c.b16 %v1424, %v1422
    %v1781 = vpack.c.b16 %v1427, %v1425
    %v1782 = vpack.c.b16 %v1428, %v1426
    %v1783 = vpack.c.b16 %v1431, %v1429
    %v1784 = vpack.c.b16 %v1432, %v1430
    %v1785 = vpack.c.b16 %v1435, %v1433
    %v1786 = vpack.c.b16 %v1436, %v1434
    %v1787 = vpack.c.b16 %v1439, %v1437
    %v1788 = vpack.c.b16 %v1440, %v1438
    %v1789 = vpack.c.b16 %v1443, %v1441
    %v1790 = vpack.c.b16 %v1444, %v1442
    %v1791 = vpack.c.b16 %v1447, %v1445
    %v1792 = vpack.c.b16 %v1448, %v1446
    %v1793 = vpack.c.b16 %v1451, %v1449
    %v1794 = vpack.c.b16 %v1452, %v1450
    %v1795 = vpack.c.b16 %v1455, %v1453
    %v1796 = vpack.c.b16 %v1456, %v1454
    %v1797 = vpack.c.b16 %v1459, %v1457
    %v1798 = vpack.c.b16 %v1460, %v1458
    %v1799 = vpack.c.b16 %v1463, %v1461
    %v1800 = vpack.c.b16 %v1464, %v1462
    %v1801 = vpack.c.b16 %v1467, %v1465
    %v1802 = vpack.c.b16 %v1468, %v1466
    %v1803 = vpack.c.b16 %v1471, %v1469
    %v1804 = vpack.c.b16 %v1472, %v1470
    %v1805 = vpack.c.b16 %v1475, %v1473
    %v1806 = vpack.c.b16 %v1476, %v1474
    %v1807 = vpack.c.b16 %v1479, %v1477
    %v1808 = vpack.c.b16 %v1480, %v1478
    %v1809 = vpack.c.b16 %v1483, %v1481
    %v1810 = vpack.c.b16 %v1484, %v1482
    %v1811 = vpack.c.b16 %v1487, %v1485
    %v1812 = vpack.c.b16 %v1488, %v1486
    %v1813 = vpack.c.b16 %v1491, %v1489
    %v1814 = vpack.c.b16 %v1492, %v1490
    %v1815 = vpack.c.b16 %v1495, %v1493
    %v1816 = vpack.c.b16 %v1496, %v1494
    %v1817 = vpack.c.b16 %v1499, %v1497
    %v1818 = vpack.c.b16 %v1500, %v1498
    %v1819 = vpack.c.b16 %v1503, %v1501
    %v1820 = vpack.c.b16 %v1504, %v1502
    %v1821 = vpack.c.b16 %v1507, %v1505
    %v1822 = vpack.c.b16 %v1508, %v1506
    %v1823 = vpack.c.b16 %v1511, %v1509
    %v1824 = vpack.c.b16 %v1512, %v1510
    %v1825 = vpack.c.b16 %v1515, %v1513
    %v1826 = vpack.c.b16 %v1516, %v1514
    %v1827 = vpack.c.b16 %v1519, %v1517
    %v1828 = vpack.c.b16 %v1520, %v1518
    %v1829 = vpack.c.b16 %v1523, %v1521
    %v1830 = vpack.c.b16 %v1524, %v1522
    %v1831 = vpack.c.b16 %v1527, %v1525
    %v1832 = vpack.c.b16 %v1528, %v1526
    %v1833 = vpack.c.b16 %v1531, %v1529
    %v1834 = vpack.c.b16 %v1532, %v1530
    %v1835 = vpack.c.b16 %v1535, %v1533
    %v1836 = vpack.c.b16 %v1536, %v1534
    %v1837 = vpack.c.b16 %v1539, %v1537
    %v1838 = vpack.c.b16 %v1540, %v1538
    %v1839 = vpack.c.b16 %v1543, %v1541
    %v1840 = vpack.c.b16 %v1544, %v1542
    %v1841 = vpack.c.b16 %v1547, %v1545
    %v1842 = vpack.c.b16 %v1548, %v1546
    %v1843 = vpack.c.b16 %v1551, %v1549
    %v1844 = vpack.c.b16 %v1552, %v1550
    %v1845 = vpack.c.b16 %v1555, %v1553
    %v1846 = vpack.c.b16 %v1556, %v1554
    %v1847 = vpack.c.b16 %v1559, %v1557
    %v1848 = vpack.c.b16 %v1560, %v1558
    %2137 = vmatpush.bf16.msra.mxu0 %v1575
    %2138 = vmatpush.bf16.msra.mxu0 %v1573
    %2139 = vmatpush.bf16.msra.mxu0 %v1571
    %2140 = vmatpush.bf16.msra.mxu0 %v1569
    %2141 = vmatpush.bf16.msra.mxu0 %v1567
    %2142 = vmatpush.bf16.msra.mxu0 %v1565
    %2143 = vmatpush.bf16.msra.mxu0 %v1563
    %2144 = vmatpush.bf16.msra.mxu0 %v1561
    %2145 = vmatmul.bf16.gmra.mxu0 %v661
    %v2146 = vpop.f32.mrf.mxu0
    %v2147 = vadd.f32 %v630, %v2146
    %v2148 = vpop.f32.mrf.mxu0
    %2149 = vdwg.mxu0
    %2150 = vmatpush.bf16.msra.mxu0 %v1591
    %2151 = vmatpush.bf16.msra.mxu0 %v1589
    %2152 = vmatpush.bf16.msra.mxu0 %v1587
    %2153 = vmatpush.bf16.msra.mxu0 %v1585
    %2154 = vmatpush.bf16.msra.mxu0 %v1583
    %2155 = vmatpush.bf16.msra.mxu0 %v1581
    %2156 = vmatpush.bf16.msra.mxu0 %v1579
    %2157 = vmatpush.bf16.msra.mxu0 %v1577
    %2158 = vmatmul.bf16.gmra.mxu0 %v662
    %v2159 = vpop.f32.mrf.mxu0
    %v2160 = vadd.f32 %v2147, %v2159
    %v2161 = vpop.f32.mrf.mxu0
    %2162 = vdwg.mxu0
    %2163 = vmatpush.bf16.msra.mxu0 %v1607
    %2164 = vmatpush.bf16.msra.mxu0 %v1605
    %2165 = vmatpush.bf16.msra.mxu0 %v1603
    %2166 = vmatpush.bf16.msra.mxu0 %v1601
    %2167 = vmatpush.bf16.msra.mxu0 %v1599
    %2168 = vmatpush.bf16.msra.mxu0 %v1597
    %2169 = vmatpush.bf16.msra.mxu0 %v1595
    %2170 = vmatpush.bf16.msra.mxu0 %v1593
    %2171 = vmatmul.bf16.gmra.mxu0 %v663
    %v2172 = vpop.f32.mrf.mxu0
    %v2173 = vadd.f32 %v2160, %v2172
    %v2174 = vpop.f32.mrf.mxu0
    %2175 = vdwg.mxu0
    %2176 = vmatpush.bf16.msra.mxu0 %v1623
    %2177 = vmatpush.bf16.msra.mxu0 %v1621
    %2178 = vmatpush.bf16.msra.mxu0 %v1619
    %2179 = vmatpush.bf16.msra.mxu0 %v1617
    %2180 = vmatpush.bf16.msra.mxu0 %v1615
    %2181 = vmatpush.bf16.msra.mxu0 %v1613
    %2182 = vmatpush.bf16.msra.mxu0 %v1611
    %2183 = vmatpush.bf16.msra.mxu0 %v1609
    %2184 = vmatmul.bf16.gmra.mxu0 %v664
    %v2185 = vpop.f32.mrf.mxu0
    %v2186 = vadd.f32 %v2173, %v2185
    %v2187 = vpop.f32.mrf.mxu0
    %2188 = vdwg.mxu0
    %2189 = vmatpush.bf16.msra.mxu0 %v1639
    %2190 = vmatpush.bf16.msra.mxu0 %v1637
    %2191 = vmatpush.bf16.msra.mxu0 %v1635
    %2192 = vmatpush.bf16.msra.mxu0 %v1633
    %2193 = vmatpush.bf16.msra.mxu0 %v1631
    %2194 = vmatpush.bf16.msra.mxu0 %v1629
    %2195 = vmatpush.bf16.msra.mxu0 %v1627
    %2196 = vmatpush.bf16.msra.mxu0 %v1625
    %2197 = vmatmul.bf16.gmra.mxu0 %v665
    %v2198 = vpop.f32.mrf.mxu0
    %v2199 = vadd.f32 %v2186, %v2198
    %v2200 = vpop.f32.mrf.mxu0
    %2201 = vdwg.mxu0
    %2202 = vmatpush.bf16.msra.mxu0 %v1655
    %2203 = vmatpush.bf16.msra.mxu0 %v1653
    %2204 = vmatpush.bf16.msra.mxu0 %v1651
    %2205 = vmatpush.bf16.msra.mxu0 %v1649
    %2206 = vmatpush.bf16.msra.mxu0 %v1647
    %2207 = vmatpush.bf16.msra.mxu0 %v1645
    %2208 = vmatpush.bf16.msra.mxu0 %v1643
    %2209 = vmatpush.bf16.msra.mxu0 %v1641
    %2210 = vmatmul.bf16.gmra.mxu0 %v666
    %v2211 = vpop.f32.mrf.mxu0
    %v2212 = vadd.f32 %v2199, %v2211
    %v2213 = vpop.f32.mrf.mxu0
    %2214 = vdwg.mxu0
    %2215 = vmatpush.bf16.msra.mxu0 %v1671
    %2216 = vmatpush.bf16.msra.mxu0 %v1669
    %2217 = vmatpush.bf16.msra.mxu0 %v1667
    %2218 = vmatpush.bf16.msra.mxu0 %v1665
    %2219 = vmatpush.bf16.msra.mxu0 %v1663
    %2220 = vmatpush.bf16.msra.mxu0 %v1661
    %2221 = vmatpush.bf16.msra.mxu0 %v1659
    %2222 = vmatpush.bf16.msra.mxu0 %v1657
    %2223 = vmatmul.bf16.gmra.mxu0 %v667
    %v2224 = vpop.f32.mrf.mxu0
    %v2225 = vadd.f32 %v2212, %v2224
    %v2226 = vpop.f32.mrf.mxu0
    %2227 = vdwg.mxu0
    %2228 = vmatpush.bf16.msra.mxu0 %v1687
    %2229 = vmatpush.bf16.msra.mxu0 %v1685
    %2230 = vmatpush.bf16.msra.mxu0 %v1683
    %2231 = vmatpush.bf16.msra.mxu0 %v1681
    %2232 = vmatpush.bf16.msra.mxu0 %v1679
    %2233 = vmatpush.bf16.msra.mxu0 %v1677
    %2234 = vmatpush.bf16.msra.mxu0 %v1675
    %2235 = vmatpush.bf16.msra.mxu0 %v1673
    %2236 = vmatmul.bf16.gmra.mxu0 %v668
    %v2237 = vpop.f32.mrf.mxu0
    %v2238 = vadd.f32 %v2225, %v2237
    %v2239 = vpop.f32.mrf.mxu0
    %2240 = vdwg.mxu0
    %2241 = vmatpush.bf16.msra.mxu0 %v1703
    %2242 = vmatpush.bf16.msra.mxu0 %v1701
    %2243 = vmatpush.bf16.msra.mxu0 %v1699
    %2244 = vmatpush.bf16.msra.mxu0 %v1697
    %2245 = vmatpush.bf16.msra.mxu0 %v1695
    %2246 = vmatpush.bf16.msra.mxu0 %v1693
    %2247 = vmatpush.bf16.msra.mxu0 %v1691
    %2248 = vmatpush.bf16.msra.mxu0 %v1689
    %2249 = vmatmul.bf16.gmra.mxu0 %v669
    %v2250 = vpop.f32.mrf.mxu0
    %v2251 = vadd.f32 %v2238, %v2250
    %v2252 = vpop.f32.mrf.mxu0
    %2253 = vdwg.mxu0
    %2254 = vmatpush.bf16.msra.mxu0 %v1719
    %2255 = vmatpush.bf16.msra.mxu0 %v1717
    %2256 = vmatpush.bf16.msra.mxu0 %v1715
    %2257 = vmatpush.bf16.msra.mxu0 %v1713
    %2258 = vmatpush.bf16.msra.mxu0 %v1711
    %2259 = vmatpush.bf16.msra.mxu0 %v1709
    %2260 = vmatpush.bf16.msra.mxu0 %v1707
    %2261 = vmatpush.bf16.msra.mxu0 %v1705
    %2262 = vmatmul.bf16.gmra.mxu0 %v670
    %v2263 = vpop.f32.mrf.mxu0
    %v2264 = vadd.f32 %v2251, %v2263
    %v2265 = vpop.f32.mrf.mxu0
    %2266 = vdwg.mxu0
    %2267 = vmatpush.bf16.msra.mxu0 %v1735
    %2268 = vmatpush.bf16.msra.mxu0 %v1733
    %2269 = vmatpush.bf16.msra.mxu0 %v1731
    %2270 = vmatpush.bf16.msra.mxu0 %v1729
    %2271 = vmatpush.bf16.msra.mxu0 %v1727
    %2272 = vmatpush.bf16.msra.mxu0 %v1725
    %2273 = vmatpush.bf16.msra.mxu0 %v1723
    %2274 = vmatpush.bf16.msra.mxu0 %v1721
    %2275 = vmatmul.bf16.gmra.mxu0 %v671
    %v2276 = vpop.f32.mrf.mxu0
    %v2277 = vadd.f32 %v2264, %v2276
    %v2278 = vpop.f32.mrf.mxu0
    %2279 = vdwg.mxu0
    %2280 = vmatpush.bf16.msra.mxu0 %v1751
    %2281 = vmatpush.bf16.msra.mxu0 %v1749
    %2282 = vmatpush.bf16.msra.mxu0 %v1747
    %2283 = vmatpush.bf16.msra.mxu0 %v1745
    %2284 = vmatpush.bf16.msra.mxu0 %v1743
    %2285 = vmatpush.bf16.msra.mxu0 %v1741
    %2286 = vmatpush.bf16.msra.mxu0 %v1739
    %2287 = vmatpush.bf16.msra.mxu0 %v1737
    %2288 = vmatmul.bf16.gmra.mxu0 %v672
    %v2289 = vpop.f32.mrf.mxu0
    %v2290 = vadd.f32 %v2277, %v2289
    %v2291 = vpop.f32.mrf.mxu0
    %2292 = vdwg.mxu0
    %2293 = vmatpush.bf16.msra.mxu0 %v1767
    %2294 = vmatpush.bf16.msra.mxu0 %v1765
    %2295 = vmatpush.bf16.msra.mxu0 %v1763
    %2296 = vmatpush.bf16.msra.mxu0 %v1761
    %2297 = vmatpush.bf16.msra.mxu0 %v1759
    %2298 = vmatpush.bf16.msra.mxu0 %v1757
    %2299 = vmatpush.bf16.msra.mxu0 %v1755
    %2300 = vmatpush.bf16.msra.mxu0 %v1753
    %2301 = vmatmul.bf16.gmra.mxu0 %v673
    %v2302 = vpop.f32.mrf.mxu0
    %v2303 = vadd.f32 %v2290, %v2302
    %v2304 = vpop.f32.mrf.mxu0
    %2305 = vdwg.mxu0
    %2306 = vmatpush.bf16.msra.mxu0 %v1783
    %2307 = vmatpush.bf16.msra.mxu0 %v1781
    %2308 = vmatpush.bf16.msra.mxu0 %v1779
    %2309 = vmatpush.bf16.msra.mxu0 %v1777
    %2310 = vmatpush.bf16.msra.mxu0 %v1775
    %2311 = vmatpush.bf16.msra.mxu0 %v1773
    %2312 = vmatpush.bf16.msra.mxu0 %v1771
    %2313 = vmatpush.bf16.msra.mxu0 %v1769
    %2314 = vmatmul.bf16.gmra.mxu0 %v674
    %v2315 = vpop.f32.mrf.mxu0
    %v2316 = vadd.f32 %v2303, %v2315
    %v2317 = vpop.f32.mrf.mxu0
    %2318 = vdwg.mxu0
    %2319 = vmatpush.bf16.msra.mxu0 %v1799
    %2320 = vmatpush.bf16.msra.mxu0 %v1797
    %2321 = vmatpush.bf16.msra.mxu0 %v1795
    %2322 = vmatpush.bf16.msra.mxu0 %v1793
    %2323 = vmatpush.bf16.msra.mxu0 %v1791
    %2324 = vmatpush.bf16.msra.mxu0 %v1789
    %2325 = vmatpush.bf16.msra.mxu0 %v1787
    %2326 = vmatpush.bf16.msra.mxu0 %v1785
    %2327 = vmatmul.bf16.gmra.mxu0 %v675
    %v2328 = vpop.f32.mrf.mxu0
    %v2329 = vadd.f32 %v2316, %v2328
    %v2330 = vpop.f32.mrf.mxu0
    %2331 = vdwg.mxu0
    %2332 = vmatpush.bf16.msra.mxu0 %v1815
    %2333 = vmatpush.bf16.msra.mxu0 %v1813
    %2334 = vmatpush.bf16.msra.mxu0 %v1811
    %2335 = vmatpush.bf16.msra.mxu0 %v1809
    %2336 = vmatpush.bf16.msra.mxu0 %v1807
    %2337 = vmatpush.bf16.msra.mxu0 %v1805
    %2338 = vmatpush.bf16.msra.mxu0 %v1803
    %2339 = vmatpush.bf16.msra.mxu0 %v1801
    %2340 = vmatmul.bf16.gmra.mxu0 %v676
    %v2341 = vpop.f32.mrf.mxu0
    %v2342 = vadd.f32 %v2329, %v2341
    %v2343 = vpop.f32.mrf.mxu0
    %2344 = vdwg.mxu0
    %2345 = vmatpush.bf16.msra.mxu0 %v1831
    %2346 = vmatpush.bf16.msra.mxu0 %v1829
    %2347 = vmatpush.bf16.msra.mxu0 %v1827
    %2348 = vmatpush.bf16.msra.mxu0 %v1825
    %2349 = vmatpush.bf16.msra.mxu0 %v1823
    %2350 = vmatpush.bf16.msra.mxu0 %v1821
    %2351 = vmatpush.bf16.msra.mxu0 %v1819
    %2352 = vmatpush.bf16.msra.mxu0 %v1817
    %2353 = vmatmul.bf16.gmra.mxu0 %v677
    %v2354 = vpop.f32.mrf.mxu0
    %v2355 = vadd.f32 %v2342, %v2354
    %v2356 = vpop.f32.mrf.mxu0
    %2357 = vdwg.mxu0
    %2358 = vmatpush.bf16.msra.mxu0 %v1847
    %2359 = vmatpush.bf16.msra.mxu0 %v1845
    %2360 = vmatpush.bf16.msra.mxu0 %v1843
    %2361 = vmatpush.bf16.msra.mxu0 %v1841
    %2362 = vmatpush.bf16.msra.mxu0 %v1839
    %2363 = vmatpush.bf16.msra.mxu0 %v1837
    %2364 = vmatpush.bf16.msra.mxu0 %v1835
    %2365 = vmatpush.bf16.msra.mxu0 %v1833
    %2366 = vmatmul.bf16.gmra.mxu0 %v678
    %v2367 = vpop.f32.mrf.mxu0
    %v2368 = vadd.f32 %v2355, %v2367
    %v2369 = vpop.f32.mrf.mxu0
    %2370 = vdwg.mxu0
    %2371 = vmatpush.bf16.msra.mxu0 %v1576
    %2372 = vmatpush.bf16.msra.mxu0 %v1574
    %2373 = vmatpush.bf16.msra.mxu0 %v1572
    %2374 = vmatpush.bf16.msra.mxu0 %v1570
    %2375 = vmatpush.bf16.msra.mxu0 %v1568
    %2376 = vmatpush.bf16.msra.mxu0 %v1566
    %2377 = vmatpush.bf16.msra.mxu0 %v1564
    %2378 = vmatpush.bf16.msra.mxu0 %v1562
    %2379 = vmatmul.bf16.gmra.mxu0 %v661
    %v2380 = vpop.f32.mrf.mxu0
    %v2381 = vadd.f32 %v631, %v2380
    %v2382 = vpop.f32.mrf.mxu0
    %2383 = vdwg.mxu0
    %2384 = vmatpush.bf16.msra.mxu0 %v1592
    %2385 = vmatpush.bf16.msra.mxu0 %v1590
    %2386 = vmatpush.bf16.msra.mxu0 %v1588
    %2387 = vmatpush.bf16.msra.mxu0 %v1586
    %2388 = vmatpush.bf16.msra.mxu0 %v1584
    %2389 = vmatpush.bf16.msra.mxu0 %v1582
    %2390 = vmatpush.bf16.msra.mxu0 %v1580
    %2391 = vmatpush.bf16.msra.mxu0 %v1578
    %2392 = vmatmul.bf16.gmra.mxu0 %v662
    %v2393 = vpop.f32.mrf.mxu0
    %v2394 = vadd.f32 %v2381, %v2393
    %v2395 = vpop.f32.mrf.mxu0
    %2396 = vdwg.mxu0
    %2397 = vmatpush.bf16.msra.mxu0 %v1608
    %2398 = vmatpush.bf16.msra.mxu0 %v1606
    %2399 = vmatpush.bf16.msra.mxu0 %v1604
    %2400 = vmatpush.bf16.msra.mxu0 %v1602
    %2401 = vmatpush.bf16.msra.mxu0 %v1600
    %2402 = vmatpush.bf16.msra.mxu0 %v1598
    %2403 = vmatpush.bf16.msra.mxu0 %v1596
    %2404 = vmatpush.bf16.msra.mxu0 %v1594
    %2405 = vmatmul.bf16.gmra.mxu0 %v663
    %v2406 = vpop.f32.mrf.mxu0
    %v2407 = vadd.f32 %v2394, %v2406
    %v2408 = vpop.f32.mrf.mxu0
    %2409 = vdwg.mxu0
    %2410 = vmatpush.bf16.msra.mxu0 %v1624
    %2411 = vmatpush.bf16.msra.mxu0 %v1622
    %2412 = vmatpush.bf16.msra.mxu0 %v1620
    %2413 = vmatpush.bf16.msra.mxu0 %v1618
    %2414 = vmatpush.bf16.msra.mxu0 %v1616
    %2415 = vmatpush.bf16.msra.mxu0 %v1614
    %2416 = vmatpush.bf16.msra.mxu0 %v1612
    %2417 = vmatpush.bf16.msra.mxu0 %v1610
    %2418 = vmatmul.bf16.gmra.mxu0 %v664
    %v2419 = vpop.f32.mrf.mxu0
    %v2420 = vadd.f32 %v2407, %v2419
    %v2421 = vpop.f32.mrf.mxu0
    %2422 = vdwg.mxu0
    %2423 = vmatpush.bf16.msra.mxu0 %v1640
    %2424 = vmatpush.bf16.msra.mxu0 %v1638
    %2425 = vmatpush.bf16.msra.mxu0 %v1636
    %2426 = vmatpush.bf16.msra.mxu0 %v1634
    %2427 = vmatpush.bf16.msra.mxu0 %v1632
    %2428 = vmatpush.bf16.msra.mxu0 %v1630
    %2429 = vmatpush.bf16.msra.mxu0 %v1628
    %2430 = vmatpush.bf16.msra.mxu0 %v1626
    %2431 = vmatmul.bf16.gmra.mxu0 %v665
    %v2432 = vpop.f32.mrf.mxu0
    %v2433 = vadd.f32 %v2420, %v2432
    %v2434 = vpop.f32.mrf.mxu0
    %2435 = vdwg.mxu0
    %2436 = vmatpush.bf16.msra.mxu0 %v1656
    %2437 = vmatpush.bf16.msra.mxu0 %v1654
    %2438 = vmatpush.bf16.msra.mxu0 %v1652
    %2439 = vmatpush.bf16.msra.mxu0 %v1650
    %2440 = vmatpush.bf16.msra.mxu0 %v1648
    %2441 = vmatpush.bf16.msra.mxu0 %v1646
    %2442 = vmatpush.bf16.msra.mxu0 %v1644
    %2443 = vmatpush.bf16.msra.mxu0 %v1642
    %2444 = vmatmul.bf16.gmra.mxu0 %v666
    %v2445 = vpop.f32.mrf.mxu0
    %v2446 = vadd.f32 %v2433, %v2445
    %v2447 = vpop.f32.mrf.mxu0
    %2448 = vdwg.mxu0
    %2449 = vmatpush.bf16.msra.mxu0 %v1672
    %2450 = vmatpush.bf16.msra.mxu0 %v1670
    %2451 = vmatpush.bf16.msra.mxu0 %v1668
    %2452 = vmatpush.bf16.msra.mxu0 %v1666
    %2453 = vmatpush.bf16.msra.mxu0 %v1664
    %2454 = vmatpush.bf16.msra.mxu0 %v1662
    %2455 = vmatpush.bf16.msra.mxu0 %v1660
    %2456 = vmatpush.bf16.msra.mxu0 %v1658
    %2457 = vmatmul.bf16.gmra.mxu0 %v667
    %v2458 = vpop.f32.mrf.mxu0
    %v2459 = vadd.f32 %v2446, %v2458
    %v2460 = vpop.f32.mrf.mxu0
    %2461 = vdwg.mxu0
    %2462 = vmatpush.bf16.msra.mxu0 %v1688
    %2463 = vmatpush.bf16.msra.mxu0 %v1686
    %2464 = vmatpush.bf16.msra.mxu0 %v1684
    %2465 = vmatpush.bf16.msra.mxu0 %v1682
    %2466 = vmatpush.bf16.msra.mxu0 %v1680
    %2467 = vmatpush.bf16.msra.mxu0 %v1678
    %2468 = vmatpush.bf16.msra.mxu0 %v1676
    %2469 = vmatpush.bf16.msra.mxu0 %v1674
    %2470 = vmatmul.bf16.gmra.mxu0 %v668
    %v2471 = vpop.f32.mrf.mxu0
    %v2472 = vadd.f32 %v2459, %v2471
    %v2473 = vpop.f32.mrf.mxu0
    %2474 = vdwg.mxu0
    %2475 = vmatpush.bf16.msra.mxu0 %v1704
    %2476 = vmatpush.bf16.msra.mxu0 %v1702
    %2477 = vmatpush.bf16.msra.mxu0 %v1700
    %2478 = vmatpush.bf16.msra.mxu0 %v1698
    %2479 = vmatpush.bf16.msra.mxu0 %v1696
    %2480 = vmatpush.bf16.msra.mxu0 %v1694
    %2481 = vmatpush.bf16.msra.mxu0 %v1692
    %2482 = vmatpush.bf16.msra.mxu0 %v1690
    %2483 = vmatmul.bf16.gmra.mxu0 %v669
    %v2484 = vpop.f32.mrf.mxu0
    %v2485 = vadd.f32 %v2472, %v2484
    %v2486 = vpop.f32.mrf.mxu0
    %2487 = vdwg.mxu0
    %2488 = vmatpush.bf16.msra.mxu0 %v1720
    %2489 = vmatpush.bf16.msra.mxu0 %v1718
    %2490 = vmatpush.bf16.msra.mxu0 %v1716
    %2491 = vmatpush.bf16.msra.mxu0 %v1714
    %2492 = vmatpush.bf16.msra.mxu0 %v1712
    %2493 = vmatpush.bf16.msra.mxu0 %v1710
    %2494 = vmatpush.bf16.msra.mxu0 %v1708
    %2495 = vmatpush.bf16.msra.mxu0 %v1706
    %2496 = vmatmul.bf16.gmra.mxu0 %v670
    %v2497 = vpop.f32.mrf.mxu0
    %v2498 = vadd.f32 %v2485, %v2497
    %v2499 = vpop.f32.mrf.mxu0
    %2500 = vdwg.mxu0
    %2501 = vmatpush.bf16.msra.mxu0 %v1736
    %2502 = vmatpush.bf16.msra.mxu0 %v1734
    %2503 = vmatpush.bf16.msra.mxu0 %v1732
    %2504 = vmatpush.bf16.msra.mxu0 %v1730
    %2505 = vmatpush.bf16.msra.mxu0 %v1728
    %2506 = vmatpush.bf16.msra.mxu0 %v1726
    %2507 = vmatpush.bf16.msra.mxu0 %v1724
    %2508 = vmatpush.bf16.msra.mxu0 %v1722
    %2509 = vmatmul.bf16.gmra.mxu0 %v671
    %v2510 = vpop.f32.mrf.mxu0
    %v2511 = vadd.f32 %v2498, %v2510
    %v2512 = vpop.f32.mrf.mxu0
    %2513 = vdwg.mxu0
    %2514 = vmatpush.bf16.msra.mxu0 %v1752
    %2515 = vmatpush.bf16.msra.mxu0 %v1750
    %2516 = vmatpush.bf16.msra.mxu0 %v1748
    %2517 = vmatpush.bf16.msra.mxu0 %v1746
    %2518 = vmatpush.bf16.msra.mxu0 %v1744
    %2519 = vmatpush.bf16.msra.mxu0 %v1742
    %2520 = vmatpush.bf16.msra.mxu0 %v1740
    %2521 = vmatpush.bf16.msra.mxu0 %v1738
    %2522 = vmatmul.bf16.gmra.mxu0 %v672
    %v2523 = vpop.f32.mrf.mxu0
    %v2524 = vadd.f32 %v2511, %v2523
    %v2525 = vpop.f32.mrf.mxu0
    %2526 = vdwg.mxu0
    %2527 = vmatpush.bf16.msra.mxu0 %v1768
    %2528 = vmatpush.bf16.msra.mxu0 %v1766
    %2529 = vmatpush.bf16.msra.mxu0 %v1764
    %2530 = vmatpush.bf16.msra.mxu0 %v1762
    %2531 = vmatpush.bf16.msra.mxu0 %v1760
    %2532 = vmatpush.bf16.msra.mxu0 %v1758
    %2533 = vmatpush.bf16.msra.mxu0 %v1756
    %2534 = vmatpush.bf16.msra.mxu0 %v1754
    %2535 = vmatmul.bf16.gmra.mxu0 %v673
    %v2536 = vpop.f32.mrf.mxu0
    %v2537 = vadd.f32 %v2524, %v2536
    %v2538 = vpop.f32.mrf.mxu0
    %2539 = vdwg.mxu0
    %2540 = vmatpush.bf16.msra.mxu0 %v1784
    %2541 = vmatpush.bf16.msra.mxu0 %v1782
    %2542 = vmatpush.bf16.msra.mxu0 %v1780
    %2543 = vmatpush.bf16.msra.mxu0 %v1778
    %2544 = vmatpush.bf16.msra.mxu0 %v1776
    %2545 = vmatpush.bf16.msra.mxu0 %v1774
    %2546 = vmatpush.bf16.msra.mxu0 %v1772
    %2547 = vmatpush.bf16.msra.mxu0 %v1770
    %2548 = vmatmul.bf16.gmra.mxu0 %v674
    %v2549 = vpop.f32.mrf.mxu0
    %v2550 = vadd.f32 %v2537, %v2549
    %v2551 = vpop.f32.mrf.mxu0
    %2552 = vdwg.mxu0
    %2553 = vmatpush.bf16.msra.mxu0 %v1800
    %2554 = vmatpush.bf16.msra.mxu0 %v1798
    %2555 = vmatpush.bf16.msra.mxu0 %v1796
    %2556 = vmatpush.bf16.msra.mxu0 %v1794
    %2557 = vmatpush.bf16.msra.mxu0 %v1792
    %2558 = vmatpush.bf16.msra.mxu0 %v1790
    %2559 = vmatpush.bf16.msra.mxu0 %v1788
    %2560 = vmatpush.bf16.msra.mxu0 %v1786
    %2561 = vmatmul.bf16.gmra.mxu0 %v675
    %v2562 = vpop.f32.mrf.mxu0
    %v2563 = vadd.f32 %v2550, %v2562
    %v2564 = vpop.f32.mrf.mxu0
    %2565 = vdwg.mxu0
    %2566 = vmatpush.bf16.msra.mxu0 %v1816
    %2567 = vmatpush.bf16.msra.mxu0 %v1814
    %2568 = vmatpush.bf16.msra.mxu0 %v1812
    %2569 = vmatpush.bf16.msra.mxu0 %v1810
    %2570 = vmatpush.bf16.msra.mxu0 %v1808
    %2571 = vmatpush.bf16.msra.mxu0 %v1806
    %2572 = vmatpush.bf16.msra.mxu0 %v1804
    %2573 = vmatpush.bf16.msra.mxu0 %v1802
    %2574 = vmatmul.bf16.gmra.mxu0 %v676
    %v2575 = vpop.f32.mrf.mxu0
    %v2576 = vadd.f32 %v2563, %v2575
    %v2577 = vpop.f32.mrf.mxu0
    %2578 = vdwg.mxu0
    %2579 = vmatpush.bf16.msra.mxu0 %v1832
    %2580 = vmatpush.bf16.msra.mxu0 %v1830
    %2581 = vmatpush.bf16.msra.mxu0 %v1828
    %2582 = vmatpush.bf16.msra.mxu0 %v1826
    %2583 = vmatpush.bf16.msra.mxu0 %v1824
    %2584 = vmatpush.bf16.msra.mxu0 %v1822
    %2585 = vmatpush.bf16.msra.mxu0 %v1820
    %2586 = vmatpush.bf16.msra.mxu0 %v1818
    %2587 = vmatmul.bf16.gmra.mxu0 %v677
    %v2588 = vpop.f32.mrf.mxu0
    %v2589 = vadd.f32 %v2576, %v2588
    %v2590 = vpop.f32.mrf.mxu0
    %2591 = vdwg.mxu0
    %2592 = vmatpush.bf16.msra.mxu0 %v1848
    %2593 = vmatpush.bf16.msra.mxu0 %v1846
    %2594 = vmatpush.bf16.msra.mxu0 %v1844
    %2595 = vmatpush.bf16.msra.mxu0 %v1842
    %2596 = vmatpush.bf16.msra.mxu0 %v1840
    %2597 = vmatpush.bf16.msra.mxu0 %v1838
    %2598 = vmatpush.bf16.msra.mxu0 %v1836
    %2599 = vmatpush.bf16.msra.mxu0 %v1834
    %2600 = vmatmul.bf16.gmra.mxu0 %v678
    %v2601 = vpop.f32.mrf.mxu0
    %v2602 = vadd.f32 %v2589, %v2601
    %v2603 = vpop.f32.mrf.mxu0
    %2604 = vdwg.mxu0
    %v2605 = vmax.f32 %v2368, 0.0
    %v2606 = vmax.f32 %v2602, 0.0
    %v2607 = vpack.c.bf16 %v2605, %v2605
    %v2608 = vpack.c.bf16 %v2606, %v2606
    %v2609 = vld [vmem:[#allocation13] sm:$0xff]
    %v2610 = vld [vmem:[#allocation13 + $0x8] sm:$0xff]
    %v2611 = vld [vmem:[#allocation13 + $0x10] sm:$0xff]
    %v2612 = vld [vmem:[#allocation13 + $0x18] sm:$0xff]
    %v2613 = vld [vmem:[#allocation13 + $0x20] sm:$0xff]
    %v2614 = vld [vmem:[#allocation13 + $0x28] sm:$0xff]
    %v2615 = vld [vmem:[#allocation13 + $0x30] sm:$0xff]
    %v2616 = vld [vmem:[#allocation13 + $0x38] sm:$0xff]
    %v2617 = vld [vmem:[#allocation13 + $0x40] sm:$0xff]
    %v2618 = vld [vmem:[#allocation13 + $0x48] sm:$0xff]
    %v2619 = vld [vmem:[#allocation13 + $0x50] sm:$0xff]
    %v2620 = vld [vmem:[#allocation13 + $0x58] sm:$0xff]
    %v2621 = vld [vmem:[#allocation13 + $0x60] sm:$0xff]
    %v2622 = vld [vmem:[#allocation13 + $0x68] sm:$0xff]
    %v2623 = vld [vmem:[#allocation13 + $0x70] sm:$0xff]
    %v2624 = vld [vmem:[#allocation13 + $0x78] sm:$0xff]
    %v2625 = vld [vmem:[#allocation13 + $0x80] sm:$0xff]
    %v2626 = vld [vmem:[#allocation13 + $0x88] sm:$0xff]
    %v2627 = vld [vmem:[#allocation13 + $0x90] sm:$0xff]
    %v2628 = vld [vmem:[#allocation13 + $0x98] sm:$0xff]
    %v2629 = vld [vmem:[#allocation13 + $0xa0] sm:$0xff]
    %v2630 = vld [vmem:[#allocation13 + $0xa8] sm:$0xff]
    %v2631 = vld [vmem:[#allocation13 + $0xb0] sm:$0xff]
    %v2632 = vld [vmem:[#allocation13 + $0xb8] sm:$0xff]
    %v2633 = vld [vmem:[#allocation13 + $0xc0] sm:$0xff]
    %v2634 = vld [vmem:[#allocation13 + $0xc8] sm:$0xff]
    %v2635 = vld [vmem:[#allocation13 + $0xd0] sm:$0xff]
    %v2636 = vld [vmem:[#allocation13 + $0xd8] sm:$0xff]
    %v2637 = vld [vmem:[#allocation13 + $0xe0] sm:$0xff]
    %v2638 = vld [vmem:[#allocation13 + $0xe8] sm:$0xff]
    %v2639 = vld [vmem:[#allocation13 + $0xf0] sm:$0xff]
    %v2640 = vld [vmem:[#allocation13 + $0xf8] sm:$0xff]
    %v2641 = vld [vmem:[#allocation14] sm:$0xff]
    %v2642 = vld [vmem:[#allocation14 + $0x8] sm:$0xff]
    %v2643 = vld [vmem:[#allocation14 + $0x10] sm:$0xff]
    %v2644 = vld [vmem:[#allocation14 + $0x18] sm:$0xff]
    %v2645 = vld [vmem:[#allocation14 + $0x20] sm:$0xff]
    %v2646 = vld [vmem:[#allocation14 + $0x28] sm:$0xff]
    %v2647 = vld [vmem:[#allocation14 + $0x30] sm:$0xff]
    %v2648 = vld [vmem:[#allocation14 + $0x38] sm:$0xff]
    %v2649 = vld [vmem:[#allocation14 + $0x40] sm:$0xff]
    %v2650 = vld [vmem:[#allocation14 + $0x48] sm:$0xff]
    %v2651 = vld [vmem:[#allocation14 + $0x50] sm:$0xff]
    %v2652 = vld [vmem:[#allocation14 + $0x58] sm:$0xff]
    %v2653 = vld [vmem:[#allocation14 + $0x60] sm:$0xff]
    %v2654 = vld [vmem:[#allocation14 + $0x68] sm:$0xff]
    %v2655 = vld [vmem:[#allocation14 + $0x70] sm:$0xff]
    %v2656 = vld [vmem:[#allocation14 + $0x78] sm:$0xff]
    %v2657 = vld [vmem:[#allocation14 + $0x80] sm:$0xff]
    %v2658 = vld [vmem:[#allocation14 + $0x88] sm:$0xff]
    %v2659 = vld [vmem:[#allocation14 + $0x90] sm:$0xff]
    %v2660 = vld [vmem:[#allocation14 + $0x98] sm:$0xff]
    %v2661 = vld [vmem:[#allocation14 + $0xa0] sm:$0xff]
    %v2662 = vld [vmem:[#allocation14 + $0xa8] sm:$0xff]
    %v2663 = vld [vmem:[#allocation14 + $0xb0] sm:$0xff]
    %v2664 = vld [vmem:[#allocation14 + $0xb8] sm:$0xff]
    %v2665 = vld [vmem:[#allocation14 + $0xc0] sm:$0xff]
    %v2666 = vld [vmem:[#allocation14 + $0xc8] sm:$0xff]
    %v2667 = vld [vmem:[#allocation14 + $0xd0] sm:$0xff]
    %v2668 = vld [vmem:[#allocation14 + $0xd8] sm:$0xff]
    %v2669 = vld [vmem:[#allocation14 + $0xe0] sm:$0xff]
    %v2670 = vld [vmem:[#allocation14 + $0xe8] sm:$0xff]
    %v2671 = vld [vmem:[#allocation14 + $0xf0] sm:$0xff]
    %v2672 = vld [vmem:[#allocation14 + $0xf8] sm:$0xff]
    %v2705 = vunpack.c.l.b16 %v2641
    %v2706 = vunpack.c.h.b16 %v2641
    %v2707 = vunpack.c.l.b16 %v2642
    %v2708 = vunpack.c.h.b16 %v2642
    %v2709 = vunpack.c.l.b16 %v2643
    %v2710 = vunpack.c.h.b16 %v2643
    %v2711 = vunpack.c.l.b16 %v2644
    %v2712 = vunpack.c.h.b16 %v2644
    %v2713 = vunpack.c.l.b16 %v2645
    %v2714 = vunpack.c.h.b16 %v2645
    %v2715 = vunpack.c.l.b16 %v2646
    %v2716 = vunpack.c.h.b16 %v2646
    %v2717 = vunpack.c.l.b16 %v2647
    %v2718 = vunpack.c.h.b16 %v2647
    %v2719 = vunpack.c.l.b16 %v2648
    %v2720 = vunpack.c.h.b16 %v2648
    %v2721 = vunpack.c.l.b16 %v2649
    %v2722 = vunpack.c.h.b16 %v2649
    %v2723 = vunpack.c.l.b16 %v2650
    %v2724 = vunpack.c.h.b16 %v2650
    %v2725 = vunpack.c.l.b16 %v2651
    %v2726 = vunpack.c.h.b16 %v2651
    %v2727 = vunpack.c.l.b16 %v2652
    %v2728 = vunpack.c.h.b16 %v2652
    %v2729 = vunpack.c.l.b16 %v2653
    %v2730 = vunpack.c.h.b16 %v2653
    %v2731 = vunpack.c.l.b16 %v2654
    %v2732 = vunpack.c.h.b16 %v2654
    %v2733 = vunpack.c.l.b16 %v2655
    %v2734 = vunpack.c.h.b16 %v2655
    %v2735 = vunpack.c.l.b16 %v2656
    %v2736 = vunpack.c.h.b16 %v2656
    %v2737 = vunpack.c.l.b16 %v2657
    %v2738 = vunpack.c.h.b16 %v2657
    %v2739 = vunpack.c.l.b16 %v2658
    %v2740 = vunpack.c.h.b16 %v2658
    %v2741 = vunpack.c.l.b16 %v2659
    %v2742 = vunpack.c.h.b16 %v2659
    %v2743 = vunpack.c.l.b16 %v2660
    %v2744 = vunpack.c.h.b16 %v2660
    %v2745 = vunpack.c.l.b16 %v2661
    %v2746 = vunpack.c.h.b16 %v2661
    %v2747 = vunpack.c.l.b16 %v2662
    %v2748 = vunpack.c.h.b16 %v2662
    %v2749 = vunpack.c.l.b16 %v2663
    %v2750 = vunpack.c.h.b16 %v2663
    %v2751 = vunpack.c.l.b16 %v2664
    %v2752 = vunpack.c.h.b16 %v2664
    %v2753 = vunpack.c.l.b16 %v2665
    %v2754 = vunpack.c.h.b16 %v2665
    %v2755 = vunpack.c.l.b16 %v2666
    %v2756 = vunpack.c.h.b16 %v2666
    %v2757 = vunpack.c.l.b16 %v2667
    %v2758 = vunpack.c.h.b16 %v2667
    %v2759 = vunpack.c.l.b16 %v2668
    %v2760 = vunpack.c.h.b16 %v2668
    %v2761 = vunpack.c.l.b16 %v2669
    %v2762 = vunpack.c.h.b16 %v2669
    %v2763 = vunpack.c.l.b16 %v2670
    %v2764 = vunpack.c.h.b16 %v2670
    %v2765 = vunpack.c.l.b16 %v2671
    %v2766 = vunpack.c.h.b16 %v2671
    %v2767 = vunpack.c.l.b16 %v2672
    %v2768 = vunpack.c.h.b16 %v2672
    %v2769 = vpack.c.b16 %v2707, %v2705
    %v2770 = vpack.c.b16 %v2708, %v2706
    %v2771 = vpack.c.b16 %v2711, %v2709
    %v2772 = vpack.c.b16 %v2712, %v2710
    %v2773 = vpack.c.b16 %v2715, %v2713
    %v2774 = vpack.c.b16 %v2716, %v2714
    %v2775 = vpack.c.b16 %v2719, %v2717
    %v2776 = vpack.c.b16 %v2720, %v2718
    %v2777 = vpack.c.b16 %v2723, %v2721
    %v2778 = vpack.c.b16 %v2724, %v2722
    %v2779 = vpack.c.b16 %v2727, %v2725
    %v2780 = vpack.c.b16 %v2728, %v2726
    %v2781 = vpack.c.b16 %v2731, %v2729
    %v2782 = vpack.c.b16 %v2732, %v2730
    %v2783 = vpack.c.b16 %v2735, %v2733
    %v2784 = vpack.c.b16 %v2736, %v2734
    %v2785 = vpack.c.b16 %v2739, %v2737
    %v2786 = vpack.c.b16 %v2740, %v2738
    %v2787 = vpack.c.b16 %v2743, %v2741
    %v2788 = vpack.c.b16 %v2744, %v2742
    %v2789 = vpack.c.b16 %v2747, %v2745
    %v2790 = vpack.c.b16 %v2748, %v2746
    %v2791 = vpack.c.b16 %v2751, %v2749
    %v2792 = vpack.c.b16 %v2752, %v2750
    %v2793 = vpack.c.b16 %v2755, %v2753
    %v2794 = vpack.c.b16 %v2756, %v2754
    %v2795 = vpack.c.b16 %v2759, %v2757
    %v2796 = vpack.c.b16 %v2760, %v2758
    %v2797 = vpack.c.b16 %v2763, %v2761
    %v2798 = vpack.c.b16 %v2764, %v2762
    %v2799 = vpack.c.b16 %v2767, %v2765
    %v2800 = vpack.c.b16 %v2768, %v2766
    %2833 = vmatpush.bf16.msra.mxu0 %v2783
    %2834 = vmatpush.bf16.msra.mxu0 %v2781
    %2835 = vmatpush.bf16.msra.mxu0 %v2779
    %2836 = vmatpush.bf16.msra.mxu0 %v2777
    %2837 = vmatpush.bf16.msra.mxu0 %v2775
    %2838 = vmatpush.bf16.msra.mxu0 %v2773
    %2839 = vmatpush.bf16.msra.mxu0 %v2771
    %2840 = vmatpush.bf16.msra.mxu0 %v2769
    %2841 = vmatmul.bf16.gmra.mxu0 %v2607
    %v2842 = vpop.f32.mrf.mxu0
    %v2843 = vadd.f32 0.0, %v2842
    %v2844 = vpop.f32.mrf.mxu0
    %2845 = vdwg.mxu0
    %2846 = vmatpush.bf16.msra.mxu0 %v2799
    %2847 = vmatpush.bf16.msra.mxu0 %v2797
    %2848 = vmatpush.bf16.msra.mxu0 %v2795
    %2849 = vmatpush.bf16.msra.mxu0 %v2793
    %2850 = vmatpush.bf16.msra.mxu0 %v2791
    %2851 = vmatpush.bf16.msra.mxu0 %v2789
    %2852 = vmatpush.bf16.msra.mxu0 %v2787
    %2853 = vmatpush.bf16.msra.mxu0 %v2785
    %2854 = vmatmul.bf16.gmra.mxu0 %v2608
    %v2855 = vpop.f32.mrf.mxu0
    %v2856 = vadd.f32 %v2843, %v2855
    %v2857 = vpop.f32.mrf.mxu0
    %2858 = vdwg.mxu0
    %2859 = vmatpush.bf16.msra.mxu0 %v2784
    %2860 = vmatpush.bf16.msra.mxu0 %v2782
    %2861 = vmatpush.bf16.msra.mxu0 %v2780
    %2862 = vmatpush.bf16.msra.mxu0 %v2778
    %2863 = vmatpush.bf16.msra.mxu0 %v2776
    %2864 = vmatpush.bf16.msra.mxu0 %v2774
    %2865 = vmatpush.bf16.msra.mxu0 %v2772
    %2866 = vmatpush.bf16.msra.mxu0 %v2770
    %2867 = vmatmul.bf16.gmra.mxu0 %v2607
    %v2868 = vpop.f32.mrf.mxu0
    %v2869 = vadd.f32 0.0, %v2868
    %v2870 = vpop.f32.mrf.mxu0
    %2871 = vdwg.mxu0
    %2872 = vmatpush.bf16.msra.mxu0 %v2800
    %2873 = vmatpush.bf16.msra.mxu0 %v2798
    %2874 = vmatpush.bf16.msra.mxu0 %v2796
    %2875 = vmatpush.bf16.msra.mxu0 %v2794
    %2876 = vmatpush.bf16.msra.mxu0 %v2792
    %2877 = vmatpush.bf16.msra.mxu0 %v2790
    %2878 = vmatpush.bf16.msra.mxu0 %v2788
    %2879 = vmatpush.bf16.msra.mxu0 %v2786
    %2880 = vmatmul.bf16.gmra.mxu0 %v2608
    %v2881 = vpop.f32.mrf.mxu0
    %v2882 = vadd.f32 %v2869, %v2881
    %v2883 = vpop.f32.mrf.mxu0
    %2884 = vdwg.mxu0
    %v2917 = vunpack.c.l.b16 %v2609
    %v2918 = vunpack.c.h.b16 %v2609
    %v2919 = vunpack.c.l.b16 %v2610
    %v2920 = vunpack.c.h.b16 %v2610
    %v2921 = vunpack.c.l.b16 %v2611
    %v2922 = vunpack.c.h.b16 %v2611
    %v2923 = vunpack.c.l.b16 %v2612
    %v2924 = vunpack.c.h.b16 %v2612
    %v2925 = vunpack.c.l.b16 %v2613
    %v2926 = vunpack.c.h.b16 %v2613
    %v2927 = vunpack.c.l.b16 %v2614
    %v2928 = vunpack.c.h.b16 %v2614
    %v2929 = vunpack.c.l.b16 %v2615
    %v2930 = vunpack.c.h.b16 %v2615
    %v2931 = vunpack.c.l.b16 %v2616
    %v2932 = vunpack.c.h.b16 %v2616
    %v2933 = vunpack.c.l.b16 %v2617
    %v2934 = vunpack.c.h.b16 %v2617
    %v2935 = vunpack.c.l.b16 %v2618
    %v2936 = vunpack.c.h.b16 %v2618
    %v2937 = vunpack.c.l.b16 %v2619
    %v2938 = vunpack.c.h.b16 %v2619
    %v2939 = vunpack.c.l.b16 %v2620
    %v2940 = vunpack.c.h.b16 %v2620
    %v2941 = vunpack.c.l.b16 %v2621
    %v2942 = vunpack.c.h.b16 %v2621
    %v2943 = vunpack.c.l.b16 %v2622
    %v2944 = vunpack.c.h.b16 %v2622
    %v2945 = vunpack.c.l.b16 %v2623
    %v2946 = vunpack.c.h.b16 %v2623
    %v2947 = vunpack.c.l.b16 %v2624
    %v2948 = vunpack.c.h.b16 %v2624
    %v2949 = vunpack.c.l.b16 %v2625
    %v2950 = vunpack.c.h.b16 %v2625
    %v2951 = vunpack.c.l.b16 %v2626
    %v2952 = vunpack.c.h.b16 %v2626
    %v2953 = vunpack.c.l.b16 %v2627
    %v2954 = vunpack.c.h.b16 %v2627
    %v2955 = vunpack.c.l.b16 %v2628
    %v2956 = vunpack.c.h.b16 %v2628
    %v2957 = vunpack.c.l.b16 %v2629
    %v2958 = vunpack.c.h.b16 %v2629
    %v2959 = vunpack.c.l.b16 %v2630
    %v2960 = vunpack.c.h.b16 %v2630
    %v2961 = vunpack.c.l.b16 %v2631
    %v2962 = vunpack.c.h.b16 %v2631
    %v2963 = vunpack.c.l.b16 %v2632
    %v2964 = vunpack.c.h.b16 %v2632
    %v2965 = vunpack.c.l.b16 %v2633
    %v2966 = vunpack.c.h.b16 %v2633
    %v2967 = vunpack.c.l.b16 %v2634
    %v2968 = vunpack.c.h.b16 %v2634
    %v2969 = vunpack.c.l.b16 %v2635
    %v2970 = vunpack.c.h.b16 %v2635
    %v2971 = vunpack.c.l.b16 %v2636
    %v2972 = vunpack.c.h.b16 %v2636
    %v2973 = vunpack.c.l.b16 %v2637
    %v2974 = vunpack.c.h.b16 %v2637
    %v2975 = vunpack.c.l.b16 %v2638
    %v2976 = vunpack.c.h.b16 %v2638
    %v2977 = vunpack.c.l.b16 %v2639
    %v2978 = vunpack.c.h.b16 %v2639
    %v2979 = vunpack.c.l.b16 %v2640
    %v2980 = vunpack.c.h.b16 %v2640
    %v2981 = vpack.c.b16 %v2919, %v2917
    %v2982 = vpack.c.b16 %v2920, %v2918
    %v2983 = vpack.c.b16 %v2923, %v2921
    %v2984 = vpack.c.b16 %v2924, %v2922
    %v2985 = vpack.c.b16 %v2927, %v2925
    %v2986 = vpack.c.b16 %v2928, %v2926
    %v2987 = vpack.c.b16 %v2931, %v2929
    %v2988 = vpack.c.b16 %v2932, %v2930
    %v2989 = vpack.c.b16 %v2935, %v2933
    %v2990 = vpack.c.b16 %v2936, %v2934
    %v2991 = vpack.c.b16 %v2939, %v2937
    %v2992 = vpack.c.b16 %v2940, %v2938
    %v2993 = vpack.c.b16 %v2943, %v2941
    %v2994 = vpack.c.b16 %v2944, %v2942
    %v2995 = vpack.c.b16 %v2947, %v2945
    %v2996 = vpack.c.b16 %v2948, %v2946
    %v2997 = vpack.c.b16 %v2951, %v2949
    %v2998 = vpack.c.b16 %v2952, %v2950
    %v2999 = vpack.c.b16 %v2955, %v2953
    %v3000 = vpack.c.b16 %v2956, %v2954
    %v3001 = vpack.c.b16 %v2959, %v2957
    %v3002 = vpack.c.b16 %v2960, %v2958
    %v3003 = vpack.c.b16 %v2963, %v2961
    %v3004 = vpack.c.b16 %v2964, %v2962
    %v3005 = vpack.c.b16 %v2967, %v2965
    %v3006 = vpack.c.b16 %v2968, %v2966
    %v3007 = vpack.c.b16 %v2971, %v2969
    %v3008 = vpack.c.b16 %v2972, %v2970
    %v3009 = vpack.c.b16 %v2975, %v2973
    %v3010 = vpack.c.b16 %v2976, %v2974
    %v3011 = vpack.c.b16 %v2979, %v2977
    %v3012 = vpack.c.b16 %v2980, %v2978
    %3045 = vmatpush.bf16.msra.mxu0 %v2995
    %3046 = vmatpush.bf16.msra.mxu0 %v2993
    %3047 = vmatpush.bf16.msra.mxu0 %v2991
    %3048 = vmatpush.bf16.msra.mxu0 %v2989
    %3049 = vmatpush.bf16.msra.mxu0 %v2987
    %3050 = vmatpush.bf16.msra.mxu0 %v2985
    %3051 = vmatpush.bf16.msra.mxu0 %v2983
    %3052 = vmatpush.bf16.msra.mxu0 %v2981
    %3053 = vmatmul.bf16.gmra.mxu0 %v329
    %v3054 = vpop.f32.mrf.mxu0
    %v3055 = vadd.f32 %v2856, %v3054
    %v3056 = vpop.f32.mrf.mxu0
    %3057 = vdwg.mxu0
    %3058 = vmatpush.bf16.msra.mxu0 %v3011
    %3059 = vmatpush.bf16.msra.mxu0 %v3009
    %3060 = vmatpush.bf16.msra.mxu0 %v3007
    %3061 = vmatpush.bf16.msra.mxu0 %v3005
    %3062 = vmatpush.bf16.msra.mxu0 %v3003
    %3063 = vmatpush.bf16.msra.mxu0 %v3001
    %3064 = vmatpush.bf16.msra.mxu0 %v2999
    %3065 = vmatpush.bf16.msra.mxu0 %v2997
    %3066 = vmatmul.bf16.gmra.mxu0 %v330
    %v3067 = vpop.f32.mrf.mxu0
    %v3068 = vadd.f32 %v3055, %v3067
    %v3069 = vpop.f32.mrf.mxu0
    %3070 = vdwg.mxu0
    %3071 = vmatpush.bf16.msra.mxu0 %v2996
    %3072 = vmatpush.bf16.msra.mxu0 %v2994
    %3073 = vmatpush.bf16.msra.mxu0 %v2992
    %3074 = vmatpush.bf16.msra.mxu0 %v2990
    %3075 = vmatpush.bf16.msra.mxu0 %v2988
    %3076 = vmatpush.bf16.msra.mxu0 %v2986
    %3077 = vmatpush.bf16.msra.mxu0 %v2984
    %3078 = vmatpush.bf16.msra.mxu0 %v2982
    %3079 = vmatmul.bf16.gmra.mxu0 %v329
    %v3080 = vpop.f32.mrf.mxu0
    %v3081 = vadd.f32 %v2882, %v3080
    %v3082 = vpop.f32.mrf.mxu0
    %3083 = vdwg.mxu0
    %3084 = vmatpush.bf16.msra.mxu0 %v3012
    %3085 = vmatpush.bf16.msra.mxu0 %v3010
    %3086 = vmatpush.bf16.msra.mxu0 %v3008
    %3087 = vmatpush.bf16.msra.mxu0 %v3006
    %3088 = vmatpush.bf16.msra.mxu0 %v3004
    %3089 = vmatpush.bf16.msra.mxu0 %v3002
    %3090 = vmatpush.bf16.msra.mxu0 %v3000
    %3091 = vmatpush.bf16.msra.mxu0 %v2998
    %3092 = vmatmul.bf16.gmra.mxu0 %v330
    %v3093 = vpop.f32.mrf.mxu0
    %v3094 = vadd.f32 %v3081, %v3093
    %v3095 = vpop.f32.mrf.mxu0
    %3096 = vdwg.mxu0
    %v3097 = vld [vmem:[#allocation16] sm:$0x3]
    %v3099 = vperm.slane %v3097, 0
    %v3100 = vperm.slane %v3097, 1
    %v3103 = vadd.f32 %v3068, %v3099
    %v3104 = vadd.f32 %v3094, %v3100
    %v3105 = vmax.f32 %v3103, 0.0
    %v3106 = vmax.f32 %v3104, 0.0
    %v3107 = vpack.c.bf16 %v3105, %v3105
    %v3108 = vpack.c.bf16 %v3106, %v3106
    %v3109 = vld [vmem:[#allocation17] sm:$0xf]
    %v3110 = vld [vmem:[#allocation17 + $0x4] sm:$0xf]
    %v3111 = vld [vmem:[#allocation17 + $0x8] sm:$0xf]
    %v3112 = vld [vmem:[#allocation17 + $0xc] sm:$0xf]
    %v3113 = vld [vmem:[#allocation17 + $0x10] sm:$0xf]
    %v3114 = vld [vmem:[#allocation17 + $0x14] sm:$0xf]
    %v3115 = vld [vmem:[#allocation17 + $0x18] sm:$0xf]
    %v3116 = vld [vmem:[#allocation17 + $0x1c] sm:$0xf]
    %v3117 = vld [vmem:[#allocation17 + $0x20] sm:$0xf]
    %v3118 = vld [vmem:[#allocation17 + $0x24] sm:$0xf]
    %v3119 = vld [vmem:[#allocation17 + $0x28] sm:$0xf]
    %v3120 = vld [vmem:[#allocation17 + $0x2c] sm:$0xf]
    %v3121 = vld [vmem:[#allocation17 + $0x30] sm:$0xf]
    %v3122 = vld [vmem:[#allocation17 + $0x34] sm:$0xf]
    %v3123 = vld [vmem:[#allocation17 + $0x38] sm:$0xf]
    %v3124 = vld [vmem:[#allocation17 + $0x3c] sm:$0xf]
    %v3125 = vld [vmem:[#allocation17 + $0x40] sm:$0xf]
    %v3126 = vld [vmem:[#allocation17 + $0x44] sm:$0xf]
    %v3127 = vld [vmem:[#allocation17 + $0x48] sm:$0xf]
    %v3128 = vld [vmem:[#allocation17 + $0x4c] sm:$0xf]
    %v3129 = vld [vmem:[#allocation17 + $0x50] sm:$0xf]
    %v3130 = vld [vmem:[#allocation17 + $0x54] sm:$0xf]
    %v3131 = vld [vmem:[#allocation17 + $0x58] sm:$0xf]
    %v3132 = vld [vmem:[#allocation17 + $0x5c] sm:$0xf]
    %v3133 = vld [vmem:[#allocation17 + $0x60] sm:$0xf]
    %v3134 = vld [vmem:[#allocation17 + $0x64] sm:$0xf]
    %v3135 = vld [vmem:[#allocation17 + $0x68] sm:$0xf]
    %v3136 = vld [vmem:[#allocation17 + $0x6c] sm:$0xf]
    %v3137 = vld [vmem:[#allocation17 + $0x70] sm:$0xf]
    %v3138 = vld [vmem:[#allocation17 + $0x74] sm:$0xf]
    %v3139 = vld [vmem:[#allocation17 + $0x78] sm:$0xf]
    %v3140 = vld [vmem:[#allocation17 + $0x7c] sm:$0xf]
    %v3141 = vld [vmem:[#allocation19] sm:$0x1]
    %v3143 = vperm.slane %v3141, 0
    %v3177 = vunpack.c.l.b16 %v3109
    %v3178 = vunpack.c.l.b16 %v3110
    %v3179 = vunpack.c.l.b16 %v3111
    %v3180 = vunpack.c.l.b16 %v3112
    %v3181 = vunpack.c.l.b16 %v3113
    %v3182 = vunpack.c.l.b16 %v3114
    %v3183 = vunpack.c.l.b16 %v3115
    %v3184 = vunpack.c.l.b16 %v3116
    %v3185 = vunpack.c.l.b16 %v3117
    %v3186 = vunpack.c.l.b16 %v3118
    %v3187 = vunpack.c.l.b16 %v3119
    %v3188 = vunpack.c.l.b16 %v3120
    %v3189 = vunpack.c.l.b16 %v3121
    %v3190 = vunpack.c.l.b16 %v3122
    %v3191 = vunpack.c.l.b16 %v3123
    %v3192 = vunpack.c.l.b16 %v3124
    %v3193 = vunpack.c.l.b16 %v3125
    %v3194 = vunpack.c.l.b16 %v3126
    %v3195 = vunpack.c.l.b16 %v3127
    %v3196 = vunpack.c.l.b16 %v3128
    %v3197 = vunpack.c.l.b16 %v3129
    %v3198 = vunpack.c.l.b16 %v3130
    %v3199 = vunpack.c.l.b16 %v3131
    %v3200 = vunpack.c.l.b16 %v3132
    %v3201 = vunpack.c.l.b16 %v3133
    %v3202 = vunpack.c.l.b16 %v3134
    %v3203 = vunpack.c.l.b16 %v3135
    %v3204 = vunpack.c.l.b16 %v3136
    %v3205 = vunpack.c.l.b16 %v3137
    %v3206 = vunpack.c.l.b16 %v3138
    %v3207 = vunpack.c.l.b16 %v3139
    %v3208 = vunpack.c.l.b16 %v3140
    %v3209 = vpack.c.b16 %v3178, %v3177
    %v3210 = vpack.c.b16 %v3180, %v3179
    %v3211 = vpack.c.b16 %v3182, %v3181
    %v3212 = vpack.c.b16 %v3184, %v3183
    %v3213 = vpack.c.b16 %v3186, %v3185
    %v3214 = vpack.c.b16 %v3188, %v3187
    %v3215 = vpack.c.b16 %v3190, %v3189
    %v3216 = vpack.c.b16 %v3192, %v3191
    %v3217 = vpack.c.b16 %v3194, %v3193
    %v3218 = vpack.c.b16 %v3196, %v3195
    %v3219 = vpack.c.b16 %v3198, %v3197
    %v3220 = vpack.c.b16 %v3200, %v3199
    %v3221 = vpack.c.b16 %v3202, %v3201
    %v3222 = vpack.c.b16 %v3204, %v3203
    %v3223 = vpack.c.b16 %v3206, %v3205
    %v3224 = vpack.c.b16 %v3208, %v3207
    %3241 = vmatpush.bf16.msra.mxu0 %v3216
    %3242 = vmatpush.bf16.msra.mxu0 %v3215
    %3243 = vmatpush.bf16.msra.mxu0 %v3214
    %3244 = vmatpush.bf16.msra.mxu0 %v3213
    %3245 = vmatpush.bf16.msra.mxu0 %v3212
    %3246 = vmatpush.bf16.msra.mxu0 %v3211
    %3247 = vmatpush.bf16.msra.mxu0 %v3210
    %3248 = vmatpush.bf16.msra.mxu0 %v3209
    %3249 = vmatmul.bf16.gmra.mxu0 %v3107
    %v3250 = vpop.f32.mrf.mxu0
    %v3251 = vadd.f32 %v3143, %v3250
    %v3252 = vpop.f32.mrf.mxu0
    %3253 = vdwg.mxu0
    %3254 = vmatpush.bf16.msra.mxu0 %v3224
    %3255 = vmatpush.bf16.msra.mxu0 %v3223
    %3256 = vmatpush.bf16.msra.mxu0 %v3222
    %3257 = vmatpush.bf16.msra.mxu0 %v3221
    %3258 = vmatpush.bf16.msra.mxu0 %v3220
    %3259 = vmatpush.bf16.msra.mxu0 %v3219
    %3260 = vmatpush.bf16.msra.mxu0 %v3218
    %3261 = vmatpush.bf16.msra.mxu0 %v3217
    %3262 = vmatmul.bf16.gmra.mxu0 %v3108
    %v3263 = vpop.f32.mrf.mxu0
    %v3264 = vadd.f32 %v3251, %v3263
    %v3265 = vpop.f32.mrf.mxu0
    %3266 = vdwg.mxu0
    %v3267 = vxor.u32 %v3264, 2147483648
    %v3268 = vmul.f32 %v3267, 1.442695
    %v3269 = vpow.pop %v3268
    %v3270 = vadd.f32 %v3269, 1.0
    %v3271 = vrcp.pop %v3270
    %v3272 = vmul.f32 %v3270, %v3271
    %v3273 = vsub.f32 1.0, %v3272
    %v3274 = vmul.f32 %v3271, %v3273
    %v3275 = vadd.f32 %v3271, %v3274
    %vm3276 = vweird.f32 %v3270
    %vm3277 = vweird.f32 %v3271
    %vm3278 = vmor %vm3276, %vm3277
    %v3279 = vsel %vm3278, %v3271, %v3275
    %v3280 = vand.u32 2147483647, %v3270
    %vm3281 = vcmp.eq.f32.partialorder %v3280, 8.507059e+37
    %v3282 = vand.u32 %v3270, 2147483648
    %v3283 = vor.u32 1.1754944e-38, %v3282
    %v3284 = vsel %vm3281, %v3283, %v3279
    %v3285 = vmul.f32 1.0, %v3284
    %3286 = vst [vmem:[#allocation20] sm:$0xff] %v3285
    // Predicated region
    $region90: #{tpu_custom_call.1} parent=1 // pred_check
      _
    $region91: #{tpu_custom_call.1} parent=1 // pred_check_branch
      %3288 = sbr.rel (0) target = $region93
    $region92: #{tpu_custom_call.1} parent=1 // pred_region
      %3290 = vsyncadd [#allocation4], 0
      %s3292 = sshll.u32 [#allocation20], 4
      %s3293 = int_to_ptr.vmem [resolvable:$true] %s3292
      %s3294 = sshll.u32 %s11, 4
      %s3295 = int_to_ptr.hbm [resolvable:$true] %s3294
      %3297 = dma.vmem_to_hbm [thread:$0]  %s3293, 128, %s3295, [#allocation4]
    $region93: #{tpu_custom_call.1} parent=1 // pred_fallthru
      _
    // Predicated region
    $region94: #{tpu_custom_call.1} parent=1 // pred_check
      _
    $region95: #{tpu_custom_call.1} parent=1 // pred_check_branch
      %3299 = sbr.rel (0) target = $region97
    $region96: #{tpu_custom_call.1} parent=1 // pred_region
      %3301 = dma.done [#allocation4], 128
    $region97: #{tpu_custom_call.1} parent=1 // pred_fallthru
      _
    %3302 = vsyncpa [#allocation3], 1
    %3303 = vsyncpa [#allocation6], 1
    %3304 = vsyncpa [#allocation9], 1
    %3305 = vsyncpa [#allocation12], 1
    %3306 = vsyncpa [#allocation15], 1
    %3307 = vsyncpa [#allocation18], 1
    %3308 = vsyncpa [#allocation4], 1

</llo_original>
